<compile_context>
chip_gen: v6e
topology: v6e:2x2x1
jax: 0.10.0
libtpu: 0.0.40
codegen_flags: <defaults>
</compile_context>

<pallas_src>
import math

import jax
import jax.numpy as jnp
from jax.experimental import pallas as pl
from jax.experimental.pallas import tpu as pltpu


def _round_up(n, m):
    return ((n + m - 1) // m) * m


def _make_kernel(T):
    """Kernel for one batch tile; activations are (C, R) with R = TB*T."""

    def kernel(x_ref, w1_ref, b1_ref, w2_ref, b2_ref,
               fc1w_ref, fc1b_ref, fc2w_ref, fc2b_ref, out_ref):
        F, R = x_ref.shape
        TB = R // T
        C1 = w1_ref.shape[0]
        C2 = w2_ref.shape[0]
        cdt = x_ref.dtype                       # MXU operand dtype (f32/bf16)

        # Boundary masks: column r = b*T + t.  Zero the tap that wrapped
        # across a window (or batch/tile) boundary after the lane roll.
        t_idx = jax.lax.broadcasted_iota(jnp.int32, (1, R), 1) % T
        keep_prev = t_idx != 0                  # x[t-1] invalid at t == 0
        keep_next = t_idx != (T - 1)            # x[t+1] invalid at t == T-1
        zero = jnp.zeros((), cdt)

        # ---- conv1 (k=3, pad=1) + ReLU: ONE (C1, 3F) x (3F, R) MXU matmul --
        xv = x_ref[...]                                             # (F, R)
        x_prev = jnp.where(keep_prev, pltpu.roll(xv, shift=1, axis=1), zero)
        x_next = jnp.where(keep_next, pltpu.roll(xv, shift=R - 1, axis=1), zero)
        taps1 = jnp.concatenate([x_prev, xv, x_next], axis=0)       # (3F, R)

        h1 = jnp.dot(w1_ref[...], taps1, preferred_element_type=jnp.float32)
        h1 = jnp.maximum(h1 + b1_ref[...], 0.0)                     # (C1, R) f32

        # ---- conv2 (k=3, pad=1) + ReLU: ONE (C2, 3C1) x (3C1, R) matmul ----
        h1c = h1.astype(cdt)
        h_prev = jnp.where(keep_prev, pltpu.roll(h1c, shift=1, axis=1), zero)
        h_next = jnp.where(keep_next, pltpu.roll(h1c, shift=R - 1, axis=1), zero)
        taps2 = jnp.concatenate([h_prev, h1c, h_next], axis=0)      # (3C1, R)

        h2 = jnp.dot(w2_ref[...], taps2, preferred_element_type=jnp.float32)
        h2 = jnp.maximum(h2 + b2_ref[...], 0.0)                     # (C2, R) f32

        # ---- AdaptiveAvgPool1d(1): grouped sum over T (1/T folded in fc1w) -
        pooled = jnp.sum(h2.reshape(C2, TB, T), axis=-1)            # (C2, TB)

        # ---- fc1 + ReLU (MXU) ----------------------------------------------
        z1 = jnp.dot(fc1w_ref[...], pooled.astype(cdt),
                     preferred_element_type=jnp.float32)
        z1 = jnp.maximum(z1 + fc1b_ref[...], 0.0)                   # (16, TB)

        # ---- fc2 (16 -> 1) on VPU/XLU + sigmoid, lane-dense output ---------
        s = jnp.sum(z1 * fc2w_ref[...], axis=0, keepdims=True)      # (1, TB)
        s = s + fc2b_ref[...]
        out_ref[...] = jax.nn.sigmoid(s).reshape(1, 1, TB)

    return kernel


def _tiled_bytes(shape, itemsize):
    """VMEM footprint of a value, including (8,128) sublane/lane padding."""
    shape = tuple(int(d) for d in shape)
    if len(shape) < 2:
        shape = (1,) * (2 - len(shape)) + shape
    lead = 1
    for d in shape[:-2]:
        lead *= d
    pack = max(1, 4 // itemsize)                # sub-32-bit packs along sublanes
    return (lead * _round_up(shape[-2], 8 * pack)
            * _round_up(shape[-1], 128) * itemsize)


def cnn_classifier_forward(x, params, *, block_b=None, mxu_dtype=jnp.float32):
    """x: (B, window_size, feature_dim) float32 -> (B, 1) float32.

    mxu_dtype: dtype of the MXU operands (weights + streamed activations).
    jnp.bfloat16 is recommended on v6e/v7x; the epilogue always stays f32.
    """
    B, T, F = x.shape
    (w1, b1, w2, b2, fc1w, fc1b, fc2w, fc2b) = params
    C1, C2 = w1.shape[-1], w2.shape[-1]         # 16, 32
    cdt = jnp.dtype(mxu_dtype)

    # Weights in the transposed orientation (out-channels on sublanes).
    w1t = w1.reshape(3 * F, C1).T.astype(cdt)            # (C1, 3F) tap-major K
    w2t = w2.reshape(3 * C1, C2).T.astype(cdt)           # (C2, 3C1)
    b1c = b1.reshape(C1, 1).astype(jnp.float32)
    b2c = b2.reshape(C2, 1).astype(jnp.float32)
    fc1wt = (fc1w.T / T).astype(cdt)                     # (16, 32); 1/T pooling folded in
    fc1bc = fc1b.reshape(-1, 1).astype(jnp.float32)      # (16, 1)
    fc2wc = fc2w.reshape(-1, 1).astype(jnp.float32)      # (16, 1), VPU reduce
    fc2bc = fc2b.reshape(1, 1).astype(jnp.float32)

    # Batch tile: TB*T must be a multiple of 128 so the x tile is lane-dense;
    # keep >=2 grid steps when the batch allows so dimension_semantics
    # ("parallel",) can shard the batch across v7x's two TensorCores.
    gran = max(8, 128 // math.gcd(T, 128))
    if block_b is None:
        block_b = _round_up(min(max(B, 1), 1024), gran)
        if B >= 2 * gran:
            block_b = min(block_b, _round_up(-(-B // 2), gran))
    TB = _round_up(block_b, gran)
    Bp = _round_up(B, TB)
    G = Bp // TB
    R = TB * T

    if Bp != B:
        x = jnp.pad(x, ((0, Bp - B), (0, 0), (0, 0)))

    # Lane-dense, pre-transposed input slab: column r = b*T + t.
    x_t = jnp.transpose(x, (2, 0, 1)).reshape(F, Bp * T).astype(cdt)

    # VMEM budget WITH (8,128) tile padding: double-buffered streamed tiles,
    # resident weights, and a generous peak set of live (C, R) intermediates.
    cb = cdt.itemsize
    x_blk = _tiled_bytes((F, R), cb)
    out_blk = _tiled_bytes((1, 1, TB), 4)
    w_bytes = sum(_tiled_bytes(a.shape, a.dtype.itemsize)
                  for a in (w1t, b1c, w2t, b2c, fc1wt, fc1bc, fc2wc, fc2bc))
    act_bytes = (3 * _tiled_bytes((F, R), cb) + _tiled_bytes((3 * F, R), cb)
                 + 2 * _tiled_bytes((C1, R), 4) + 3 * _tiled_bytes((C1, R), cb)
                 + _tiled_bytes((3 * C1, R), cb) + 2 * _tiled_bytes((C2, R), 4)
                 + _tiled_bytes((C2, TB), 4) + 2 * _tiled_bytes((16, TB), 4))
    vmem_limit = 2 * (x_blk + out_blk) + 2 * w_bytes + act_bytes + (4 << 20)
    # 48 MiB cap keeps headroom on v7x (64 MiB physical); v5e/v6e have 128 MiB.
    vmem_limit = int(min(48 << 20, max(16 << 20, vmem_limit)))

    def const_spec(arr):
        nd = arr.ndim
        return pl.BlockSpec(arr.shape, lambda i, _nd=nd: (0,) * _nd)

    out = pl.pallas_call(
        _make_kernel(T),
        out_shape=jax.ShapeDtypeStruct((G, 1, TB), jnp.float32),
        grid=(G,),
        in_specs=[
            pl.BlockSpec((F, R), lambda i: (0, i)),   # streamed lane-dense x
            const_spec(w1t), const_spec(b1c),
            const_spec(w2t), const_spec(b2c),
            const_spec(fc1wt), const_spec(fc1bc),
            const_spec(fc2wc), const_spec(fc2bc),
        ],
        out_specs=pl.BlockSpec((1, 1, TB), lambda i: (i, 0, 0)),
        compiler_params=pltpu.CompilerParams(
            dimension_semantics=("parallel",),
            vmem_limit_bytes=vmem_limit,
        ),
    )(x_t, w1t, b1c, w2t, b2c, fc1wt, fc1bc, fc2wc, fc2bc)

    # (G, 1, TB) lane-dense tiles -> (B, 1); padded batch rows sliced away.
    return out.reshape(Bp)[:B].reshape(B, 1)


def init_params(key, feature_dim):
    """Deterministic synthetic parameters (shapes follow the PyTorch module).

    PyTorch Conv1d weight is (C_out, C_in, K); we store it tap-major as
    (K, C_in, C_out).  Linear weight (out, in) is stored transposed (in, out).
    """
    ks = jax.random.split(key, 8)
    s = 0.1
    w1 = s * jax.random.normal(ks[0], (3, feature_dim, 16), jnp.float32)
    b1 = s * jax.random.normal(ks[1], (1, 16), jnp.float32)
    w2 = s * jax.random.normal(ks[2], (3, 16, 32), jnp.float32)
    b2 = s * jax.random.normal(ks[3], (1, 32), jnp.float32)
    fc1w = s * jax.random.normal(ks[4], (32, 16), jnp.float32)
    fc1b = s * jax.random.normal(ks[5], (1, 16), jnp.float32)
    fc2w = s * jax.random.normal(ks[6], (16, 1), jnp.float32)
    fc2b = s * jax.random.normal(ks[7], (1, 1), jnp.float32)
    return (w1, b1, w2, b2, fc1w, fc1b, fc2w, fc2b)


def reference_forward(x, params):
    """Pure-JAX reference mirroring the PyTorch semantics (for verification)."""
    (w1, b1, w2, b2, fc1w, fc1b, fc2w, fc2b) = params
    B, T, F = x.shape
    hi = jax.lax.Precision.HIGHEST

    def conv1d_same(h, w, b):  # h: (B,T,Cin), w: (3,Cin,Cout)
        hp = jnp.pad(h, ((0, 0), (1, 1), (0, 0)))
        out = sum(jnp.einsum('btc,co->bto', hp[:, k:k + T, :], w[k], precision=hi)
                  for k in range(3))
        return jax.nn.relu(out + b)

    h1 = conv1d_same(x, w1, b1)
    h2 = conv1d_same(h1, w2, b2)
    pooled = jnp.mean(h2, axis=1)
    z1 = jax.nn.relu(jnp.dot(pooled, fc1w, precision=hi) + fc1b)
    return jax.nn.sigmoid(jnp.dot(z1, fc2w, precision=hi) + fc2b)


if __name__ == "__main__":
    key = jax.random.PRNGKey(0)
    kx, kp = jax.random.split(key)

    batch, window_size, feature_dim = 2, 8, 4
    x = jax.random.normal(kx, (batch, window_size, feature_dim), jnp.float32)
    params = init_params(kp, feature_dim)

    ref = reference_forward(x, params)

    # f32 MXU-operand path (exact numerics, default / v5e-friendly).
    out = jax.block_until_ready(cnn_classifier_forward(x, params))
    assert out.shape == (batch, 1)
    assert jnp.allclose(out, ref, atol=5e-5, rtol=5e-5)

    # bf16 MXU-operand path (recommended on v6e/v7x); epilogue stays f32.
    out_bf16 = jax.block_until_ready(
        cnn_classifier_forward(x, params, mxu_dtype=jnp.bfloat16))
    assert out_bf16.shape == (batch, 1)
    assert jnp.allclose(out_bf16, ref, atol=5e-2, rtol=5e-2)

    print("KERNEL_OK")
</pallas_src>

<mosaic_0001>
module attributes {stable_mosaic.version = 11 : i64} {
  func.func @kernel(%arg0: i32, %arg1: memref<4x128xf32, #tpu.memory_space<vmem>>, %arg2: memref<16x12xf32, #tpu.memory_space<vmem>>, %arg3: memref<16x1xf32, #tpu.memory_space<vmem>>, %arg4: memref<32x48xf32, #tpu.memory_space<vmem>>, %arg5: memref<32x1xf32, #tpu.memory_space<vmem>>, %arg6: memref<16x32xf32, #tpu.memory_space<vmem>>, %arg7: memref<16x1xf32, #tpu.memory_space<vmem>>, %arg8: memref<16x1xf32, #tpu.memory_space<vmem>>, %arg9: memref<1x1xf32, #tpu.memory_space<vmem>>, %arg10: memref<1x1x16xf32, #tpu.memory_space<vmem>>) attributes {dimension_semantics = [#tpu.dimension_semantics<parallel>], iteration_bounds = array<i64: 1>, scalar_prefetch = 0 : i64, scratch_operands = 0 : i64, tpu.core_type = #tpu.core_type<tc>, window_params = [{transform_indices = @transform_0, window_bounds = array<i64: 4, 128>}, {pipeline_mode = #tpu.pipeline_mode<synchronous>, transform_indices = @transform_1, window_bounds = array<i64: 16, 12>}, {pipeline_mode = #tpu.pipeline_mode<synchronous>, transform_indices = @transform_2, window_bounds = array<i64: 16, 1>}, {pipeline_mode = #tpu.pipeline_mode<synchronous>, transform_indices = @transform_3, window_bounds = array<i64: 32, 48>}, {pipeline_mode = #tpu.pipeline_mode<synchronous>, transform_indices = @transform_4, window_bounds = array<i64: 32, 1>}, {pipeline_mode = #tpu.pipeline_mode<synchronous>, transform_indices = @transform_5, window_bounds = array<i64: 16, 32>}, {pipeline_mode = #tpu.pipeline_mode<synchronous>, transform_indices = @transform_6, window_bounds = array<i64: 16, 1>}, {pipeline_mode = #tpu.pipeline_mode<synchronous>, transform_indices = @transform_7, window_bounds = array<i64: 16, 1>}, {pipeline_mode = #tpu.pipeline_mode<synchronous>, transform_indices = @transform_8, window_bounds = array<i64: 1, 1>}, {transform_indices = @transform_9, window_bounds = array<i64: 1, 1, 16>}]} {
    %0 = tpu.iota {dimensions = array<i32: 1>} : vector<1x128xi32>
    %c8_i32 = arith.constant 8 : i32
    %c0_i32 = arith.constant 0 : i32
    %1 = arith.cmpi eq, %c8_i32, %c0_i32 : i32
    %c1_i32 = arith.constant 1 : i32
    %2 = arith.select %1, %c1_i32, %c8_i32 : i32
    %3 = vector.broadcast %2 : i32 to vector<1x128xi32>
    %4 = arith.remsi %0, %3 : vector<1x128xi32>
    %c0_i32_0 = arith.constant 0 : i32
    %5 = vector.broadcast %c0_i32_0 : i32 to vector<1x128xi32>
    %6 = arith.cmpi ne, %4, %5 : vector<1x128xi32>
    %c0_i32_1 = arith.constant 0 : i32
    %7 = vector.broadcast %c0_i32_1 : i32 to vector<1x128xi32>
    %8 = arith.cmpi slt, %4, %7 : vector<1x128xi32>
    %c0_i32_2 = arith.constant 0 : i32
    %9 = arith.cmpi slt, %2, %c0_i32_2 : i32
    %10 = vector.broadcast %9 : i1 to vector<1x128xi1>
    %11 = vector.broadcast %10 : vector<1x128xi1> to vector<1x128xi1>
    %12 = arith.xori %8, %11 : vector<1x128xi1>
    %13 = arith.andi %12, %6 : vector<1x128xi1>
    %14 = vector.broadcast %2 : i32 to vector<1x128xi32>
    %15 = arith.addi %4, %14 : vector<1x128xi32>
    %16 = arith.select %13, %15, %4 : vector<1x128xi1>, vector<1x128xi32>
    %c0_i32_3 = arith.constant 0 : i32
    %17 = vector.broadcast %c0_i32_3 : i32 to vector<1x128xi32>
    %18 = arith.cmpi ne, %16, %17 : vector<1x128xi32>
    %c7_i32 = arith.constant 7 : i32
    %19 = vector.broadcast %c7_i32 : i32 to vector<1x128xi32>
    %20 = arith.cmpi ne, %16, %19 : vector<1x128xi32>
    %c0 = arith.constant 0 : index
    %c0_4 = arith.constant 0 : index
    %21 = vector.load %arg1[%c0, %c0_4] : memref<4x128xf32, #tpu.memory_space<vmem>>, vector<4x128xf32>
    %c1_i32_5 = arith.constant 1 : i32
    %22 = tpu.dynamic_rotate %21 by %c1_i32_5 dim 1 : vector<4x128xf32>, i32 -> vector<4x128xf32>
    %cst = arith.constant 0.000000e+00 : f32
    %23 = vector.shape_cast %18 : vector<1x128xi1> to vector<1x128xi1>
    %24 = vector.broadcast %23 : vector<1x128xi1> to vector<4x128xi1>
    %25 = vector.broadcast %cst : f32 to vector<4x128xf32>
    %26 = arith.select %24, %22, %25 : vector<4x128xi1>, vector<4x128xf32>
    %c127_i32 = arith.constant 127 : i32
    %27 = tpu.dynamic_rotate %21 by %c127_i32 dim 1 : vector<4x128xf32>, i32 -> vector<4x128xf32>
    %cst_6 = arith.constant 0.000000e+00 : f32
    %28 = vector.shape_cast %20 : vector<1x128xi1> to vector<1x128xi1>
    %29 = vector.broadcast %28 : vector<1x128xi1> to vector<4x128xi1>
    %30 = vector.broadcast %cst_6 : f32 to vector<4x128xf32>
    %31 = arith.select %29, %27, %30 : vector<4x128xi1>, vector<4x128xf32>
    %32 = tpu.concatenate %26, %21, %31 in 0 : vector<4x128xf32>, vector<4x128xf32>, vector<4x128xf32> -> vector<12x128xf32>
    %c0_7 = arith.constant 0 : index
    %c0_8 = arith.constant 0 : index
    %33 = vector.load %arg2[%c0_7, %c0_8] : memref<16x12xf32, #tpu.memory_space<vmem>>, vector<16x12xf32>
    %cst_9 = arith.constant dense<0.000000e+00> : vector<16x128xf32>
    %34 = tpu.matmul %33, %32, %cst_9 {dimension_numbers = #tpu.dot_dimension_numbers<[1], [0], [0], [1], [0, 0, 1, 1], [], []>} : vector<16x12xf32>, vector<12x128xf32>, vector<16x128xf32> -> vector<16x128xf32>
    %c0_10 = arith.constant 0 : index
    %c0_11 = arith.constant 0 : index
    %35 = vector.load %arg3[%c0_10, %c0_11] : memref<16x1xf32, #tpu.memory_space<vmem>>, vector<16x1xf32>
    %36 = vector.broadcast %35 : vector<16x1xf32> to vector<16x128xf32>
    %37 = arith.addf %34, %36 : vector<16x128xf32>
    %cst_12 = arith.constant 0.000000e+00 : f32
    %38 = vector.broadcast %cst_12 : f32 to vector<16x128xf32>
    %39 = arith.maximumf %37, %38 : vector<16x128xf32>
    %c1_i32_13 = arith.constant 1 : i32
    %40 = tpu.dynamic_rotate %39 by %c1_i32_13 dim 1 : vector<16x128xf32>, i32 -> vector<16x128xf32>
    %cst_14 = arith.constant 0.000000e+00 : f32
    %41 = vector.shape_cast %18 : vector<1x128xi1> to vector<1x128xi1>
    %42 = vector.broadcast %41 : vector<1x128xi1> to vector<16x128xi1>
    %43 = vector.broadcast %cst_14 : f32 to vector<16x128xf32>
    %44 = arith.select %42, %40, %43 : vector<16x128xi1>, vector<16x128xf32>
    %c127_i32_15 = arith.constant 127 : i32
    %45 = tpu.dynamic_rotate %39 by %c127_i32_15 dim 1 : vector<16x128xf32>, i32 -> vector<16x128xf32>
    %cst_16 = arith.constant 0.000000e+00 : f32
    %46 = vector.shape_cast %20 : vector<1x128xi1> to vector<1x128xi1>
    %47 = vector.broadcast %46 : vector<1x128xi1> to vector<16x128xi1>
    %48 = vector.broadcast %cst_16 : f32 to vector<16x128xf32>
    %49 = arith.select %47, %45, %48 : vector<16x128xi1>, vector<16x128xf32>
    %50 = tpu.concatenate %44, %39, %49 in 0 : vector<16x128xf32>, vector<16x128xf32>, vector<16x128xf32> -> vector<48x128xf32>
    %c0_17 = arith.constant 0 : index
    %c0_18 = arith.constant 0 : index
    %51 = vector.load %arg4[%c0_17, %c0_18] : memref<32x48xf32, #tpu.memory_space<vmem>>, vector<32x48xf32>
    %cst_19 = arith.constant dense<0.000000e+00> : vector<32x128xf32>
    %52 = tpu.matmul %51, %50, %cst_19 {dimension_numbers = #tpu.dot_dimension_numbers<[1], [0], [0], [1], [0, 0, 1, 1], [], []>} : vector<32x48xf32>, vector<48x128xf32>, vector<32x128xf32> -> vector<32x128xf32>
    %c0_20 = arith.constant 0 : index
    %c0_21 = arith.constant 0 : index
    %53 = vector.load %arg5[%c0_20, %c0_21] : memref<32x1xf32, #tpu.memory_space<vmem>>, vector<32x1xf32>
    %54 = vector.broadcast %53 : vector<32x1xf32> to vector<32x128xf32>
    %55 = arith.addf %52, %54 : vector<32x128xf32>
    %cst_22 = arith.constant 0.000000e+00 : f32
    %56 = vector.broadcast %cst_22 : f32 to vector<32x128xf32>
    %57 = arith.maximumf %55, %56 : vector<32x128xf32>
    %58 = vector.shape_cast %57 : vector<32x128xf32> to vector<32x16x8xf32>
    %cst_23 = arith.constant dense<0.000000e+00> : vector<32x16xf32>
    %59 = vector.multi_reduction <add>, %58, %cst_23 [2] : vector<32x16x8xf32> to vector<32x16xf32>
    %c0_24 = arith.constant 0 : index
    %c0_25 = arith.constant 0 : index
    %60 = vector.load %arg6[%c0_24, %c0_25] : memref<16x32xf32, #tpu.memory_space<vmem>>, vector<16x32xf32>
    %cst_26 = arith.constant dense<0.000000e+00> : vector<16x16xf32>
    %61 = tpu.matmul %60, %59, %cst_26 {dimension_numbers = #tpu.dot_dimension_numbers<[1], [0], [0], [1], [0, 0, 1, 1], [], []>} : vector<16x32xf32>, vector<32x16xf32>, vector<16x16xf32> -> vector<16x16xf32>
    %c0_27 = arith.constant 0 : index
    %c0_28 = arith.constant 0 : index
    %62 = vector.load %arg7[%c0_27, %c0_28] : memref<16x1xf32, #tpu.memory_space<vmem>>, vector<16x1xf32>
    %63 = vector.broadcast %62 : vector<16x1xf32> to vector<16x16xf32>
    %64 = arith.addf %61, %63 : vector<16x16xf32>
    %cst_29 = arith.constant 0.000000e+00 : f32
    %65 = vector.broadcast %cst_29 : f32 to vector<16x16xf32>
    %66 = arith.maximumf %64, %65 : vector<16x16xf32>
    %c0_30 = arith.constant 0 : index
    %c0_31 = arith.constant 0 : index
    %67 = vector.load %arg8[%c0_30, %c0_31] : memref<16x1xf32, #tpu.memory_space<vmem>>, vector<16x1xf32>
    %68 = vector.broadcast %67 : vector<16x1xf32> to vector<16x16xf32>
    %69 = arith.mulf %66, %68 : vector<16x16xf32>
    %cst_32 = arith.constant dense<0.000000e+00> : vector<16xf32>
    %70 = vector.multi_reduction <add>, %69, %cst_32 [0] : vector<16x16xf32> to vector<16xf32>
    %71 = vector.shape_cast %70 : vector<16xf32> to vector<1x16xf32>
    %c0_33 = arith.constant 0 : index
    %c0_34 = arith.constant 0 : index
    %72 = vector.load %arg9[%c0_33, %c0_34] : memref<1x1xf32, #tpu.memory_space<vmem>>, vector<1x1xf32>
    %73 = vector.broadcast %72 : vector<1x1xf32> to vector<1x16xf32>
    %74 = arith.addf %71, %73 : vector<1x16xf32>
    %75 = arith.negf %74 : vector<1x16xf32>
    %76 = math.exp %75 : vector<1x16xf32>
    %cst_35 = arith.constant 1.000000e+00 : f32
    %77 = vector.broadcast %cst_35 : f32 to vector<1x16xf32>
    %78 = arith.addf %77, %76 : vector<1x16xf32>
    %79 = arith.divf %77, %78 : vector<1x16xf32>
    %80 = vector.shape_cast %79 : vector<1x16xf32> to vector<1x1x16xf32>
    %c0_36 = arith.constant 0 : index
    %c0_37 = arith.constant 0 : index
    %c0_38 = arith.constant 0 : index
    %81 = vector.load %arg10[%c0_36, %c0_37, %c0_38] : memref<1x1x16xf32, #tpu.memory_space<vmem>>, vector<1x1x16xf32>
    tpu.vector_store %arg10[%c0_36, %c0_37, %c0_38], %80 {strides = array<i32>} : memref<1x1x16xf32, #tpu.memory_space<vmem>>, vector<1x1x16xf32>,
    return
  }
  func.func @transform_0(%arg0: i32) -> (i32, i32) {
    %c0_i32 = arith.constant 0 : i32
    %c0_i32_0 = arith.constant 0 : i32
    return %c0_i32, %arg0 : i32, i32
  }
  func.func @transform_1(%arg0: i32) -> (i32, i32) {
    %c0_i32 = arith.constant 0 : i32
    %c0_i32_0 = arith.constant 0 : i32
    %c0_i32_1 = arith.constant 0 : i32
    return %c0_i32, %c0_i32_0 : i32, i32
  }
  func.func @transform_2(%arg0: i32) -> (i32, i32) {
    %c0_i32 = arith.constant 0 : i32
    %c0_i32_0 = arith.constant 0 : i32
    %c0_i32_1 = arith.constant 0 : i32
    return %c0_i32, %c0_i32_0 : i32, i32
  }
  func.func @transform_3(%arg0: i32) -> (i32, i32) {
    %c0_i32 = arith.constant 0 : i32
    %c0_i32_0 = arith.constant 0 : i32
    %c0_i32_1 = arith.constant 0 : i32
    return %c0_i32, %c0_i32_0 : i32, i32
  }
  func.func @transform_4(%arg0: i32) -> (i32, i32) {
    %c0_i32 = arith.constant 0 : i32
    %c0_i32_0 = arith.constant 0 : i32
    %c0_i32_1 = arith.constant 0 : i32
    return %c0_i32, %c0_i32_0 : i32, i32
  }
  func.func @transform_5(%arg0: i32) -> (i32, i32) {
    %c0_i32 = arith.constant 0 : i32
    %c0_i32_0 = arith.constant 0 : i32
    %c0_i32_1 = arith.constant 0 : i32
    return %c0_i32, %c0_i32_0 : i32, i32
  }
  func.func @transform_6(%arg0: i32) -> (i32, i32) {
    %c0_i32 = arith.constant 0 : i32
    %c0_i32_0 = arith.constant 0 : i32
    %c0_i32_1 = arith.constant 0 : i32
    return %c0_i32, %c0_i32_0 : i32, i32
  }
  func.func @transform_7(%arg0: i32) -> (i32, i32) {
    %c0_i32 = arith.constant 0 : i32
    %c0_i32_0 = arith.constant 0 : i32
    %c0_i32_1 = arith.constant 0 : i32
    return %c0_i32, %c0_i32_0 : i32, i32
  }
  func.func @transform_8(%arg0: i32) -> (i32, i32) {
    %c0_i32 = arith.constant 0 : i32
    %c0_i32_0 = arith.constant 0 : i32
    %c0_i32_1 = arith.constant 0 : i32
    return %c0_i32, %c0_i32_0 : i32, i32
  }
  func.func @transform_9(%arg0: i32) -> (i32, i32, i32) {
    %c0_i32 = arith.constant 0 : i32
    %c0_i32_0 = arith.constant 0 : i32
    %c0_i32_1 = arith.constant 0 : i32
    return %arg0, %c0_i32, %c0_i32_0 : i32, i32, i32
  }
}

</mosaic_0001>

<llo_original>
// kernel: tpu_custom_call.1
$region0: #{tpu_custom_call.1}
  #allocation0 [shape = 'u32[]', space=smem, size = 0x4, offset = 0x4, fixed_abs, tag = 'smem constant byte address 0x4 - core index']
  #allocation1 [shape = 'u32[144,128]{1,0:T(1,128)}', space=vmem, size = 0x12000, scoped, tag = 'internal scratch']
  #allocation2 [shape = 'f32[1,1]{1,0:T(1,128)S(1)}', space=vmem, size = 0x200, scoped, tag = 'scoped memory for tpu_custom_call.1']
  %s0 = inlined_call_operand.vmem [shape: f32[4,128], index: 0, kind: input, shape index: {}]
  %s1 = inlined_call_operand.vmem [shape: f32[16,12], index: 1, kind: input, shape index: {}]
  %s2 = inlined_call_operand.vmem [shape: f32[16,1], index: 2, kind: input, shape index: {}]
  %s3 = inlined_call_operand.vmem [shape: f32[32,48], index: 3, kind: input, shape index: {}]
  %s4 = inlined_call_operand.vmem [shape: f32[32,1], index: 4, kind: input, shape index: {}]
  %s5 = inlined_call_operand.vmem [shape: f32[16,32], index: 5, kind: input, shape index: {}]
  %s6 = inlined_call_operand.vmem [shape: f32[16,1], index: 6, kind: input, shape index: {}]
  %s7 = inlined_call_operand.vmem [shape: f32[16,1], index: 7, kind: input, shape index: {}]
  %s8 = inlined_call_operand.<no memory space> [shape: f32[1,1], index: 8, kind: input, shape index: {}]
  %s9 = inlined_call_operand.hbm [shape: f32[1,1,16], index: 9, kind: output, shape index: {}]
  %s10 = sld [smem:[#allocation0]]
  $region46: #{tpu_custom_call.1} parent=0
    _
  %s12 = ssub.s32 1, %s10
  %s13 = scalar_select 0, %s12, %s10
  %v14 = vstv %s8
  %15 = vst [vmem:[#allocation2] sm:$0x1] %v14
  $region1: #{tpu_custom_call.1} parent=0
    #allocation3 [shape = 'u8[512]{0}', space=vmem, size = 0x400, scoped, tag = 'output window, operand 0, single buffered']
    #allocation4 [shape = 's32[1]{0}', space=sflag, size = 0x4, scoped, tag = 'scoped memory for tpu_custom_call.1']
    %16 = vsyncpa [#allocation4], 0
    // Predicated region
    $region2: #{tpu_custom_call.1} parent=1 // pred_check
      _
    $region3: #{tpu_custom_call.1} parent=1 // pred_check_branch
      %18 = sbr.rel (0) target = $region5
    $region4: #{tpu_custom_call.1} parent=1 // pred_region
      _
    $region5: #{tpu_custom_call.1} parent=1 // pred_fallthru
      _
    // Predicated region
    $region6: #{tpu_custom_call.1} parent=1 // pred_check
      _
    $region7: #{tpu_custom_call.1} parent=1 // pred_check_branch
      %20 = sbr.rel (0) target = $region9
    $region8: #{tpu_custom_call.1} parent=1 // pred_region
      _
    $region9: #{tpu_custom_call.1} parent=1 // pred_fallthru
      _
    // Predicated region
    $region10: #{tpu_custom_call.1} parent=1 // pred_check
      _
    $region11: #{tpu_custom_call.1} parent=1 // pred_check_branch
      %22 = sbr.rel (0) target = $region13
    $region12: #{tpu_custom_call.1} parent=1 // pred_region
      _
    $region13: #{tpu_custom_call.1} parent=1 // pred_fallthru
      _
    // Predicated region
    $region14: #{tpu_custom_call.1} parent=1 // pred_check
      _
    $region15: #{tpu_custom_call.1} parent=1 // pred_check_branch
      %24 = sbr.rel (0) target = $region17
    $region16: #{tpu_custom_call.1} parent=1 // pred_region
      _
    $region17: #{tpu_custom_call.1} parent=1 // pred_fallthru
      _
    // Predicated region
    $region18: #{tpu_custom_call.1} parent=1 // pred_check
      _
    $region19: #{tpu_custom_call.1} parent=1 // pred_check_branch
      %26 = sbr.rel (0) target = $region21
    $region20: #{tpu_custom_call.1} parent=1 // pred_region
      _
    $region21: #{tpu_custom_call.1} parent=1 // pred_fallthru
      _
    // Predicated region
    $region22: #{tpu_custom_call.1} parent=1 // pred_check
      _
    $region23: #{tpu_custom_call.1} parent=1 // pred_check_branch
      %28 = sbr.rel (0) target = $region25
    $region24: #{tpu_custom_call.1} parent=1 // pred_region
      _
    $region25: #{tpu_custom_call.1} parent=1 // pred_fallthru
      _
    // Predicated region
    $region26: #{tpu_custom_call.1} parent=1 // pred_check
      _
    $region27: #{tpu_custom_call.1} parent=1 // pred_check_branch
      %30 = sbr.rel (0) target = $region29
    $region28: #{tpu_custom_call.1} parent=1 // pred_region
      _
    $region29: #{tpu_custom_call.1} parent=1 // pred_fallthru
      _
    // Predicated region
    $region30: #{tpu_custom_call.1} parent=1 // pred_check
      _
    $region31: #{tpu_custom_call.1} parent=1 // pred_check_branch
      %32 = sbr.rel (0) target = $region33
    $region32: #{tpu_custom_call.1} parent=1 // pred_region
      _
    $region33: #{tpu_custom_call.1} parent=1 // pred_fallthru
      _
    // Predicated region
    $region34: #{tpu_custom_call.1} parent=1 // pred_check
      _
    $region35: #{tpu_custom_call.1} parent=1 // pred_check_branch
      %34 = sbr.rel (0) target = $region37
    $region36: #{tpu_custom_call.1} parent=1 // pred_region
      _
    $region37: #{tpu_custom_call.1} parent=1 // pred_fallthru
      _
    %v35 = vlaneseq
    %v36 = vand.u32 %v35, 127
    %vm37 = vcmp.lt.s32.totalorder %v36, 0
    %v38 = vsub.s32 0, %v36
    %v39 = vsel %vm37, %v38, %v36
    %v40 = vshrl.u32 %v39, 3
    %v41 = vand.u32 %v39, 7
    %v42 = vsub.s32 0, %v41
    %v43 = vsel %vm37, %v42, %v41
    %vm44 = vcmp.ne.s32.totalorder %v43, 0
    %vm45 = vcmp.lt.s32.totalorder %v43, 0
    %vm46 = vmand %vm45, %vm44
    %v47 = vadd.s32 %v43, 8
    %v48 = vsel %vm46, %v47, %v43
    %vm49 = vcmp.ne.s32.totalorder %v48, 0
    %vm50 = vcmp.ne.s32.totalorder %v48, 7
    %v51 = vld [vmem:[%s0] sm:$0xf]
    %52 = vrot.lane.b32.xlu0 %v51, 1
    %v53 = vpop.permute.xlu0 %52
    %v54 = vsel %vm49, 1, 0
    %vm55 = vcmp.eq.s32.totalorder %v54, 1
    %v56 = vsel %vm55, %v53, 0.0
    %57 = vrot.lane.b32.xlu0 %v51, 127
    %v58 = vpop.permute.xlu0 %57
    %v59 = vsel %vm50, 1, 0
    %vm60 = vcmp.eq.s32.totalorder %v59, 1
    %v61 = vsel %vm60, %v58, 0.0
    %v63 = vrot.slane %v51, 4
    %vm65 = vcmask 1043456
    %v66 = vsel %vm65, %v56, %v63
    %v67 = vld [vmem:[%s1] sm:$0xff]
    %v68 = vld [vmem:[%s1 + $0x8] sm:$0xff]
    %v69 = vld [vmem:[%s2] sm:$0xff]
    %v70 = vld [vmem:[%s2 + $0x8] sm:$0xff]
    %72 = vset.pattern.permute.xlu0 0
    %73 = vperm.xlu0 %72, %v69
    %v74 = vpop.permute.xlu0 %73
    %77 = vset.pattern.permute.xlu0 0
    %78 = vperm.xlu0 %77, %v70
    %v79 = vpop.permute.xlu0 %78
    %vm81 = vcmask 97280
    %v83 = vsel %vm81, %v67, 0
    %v86 = vsel %vm81, %v68, 0
    %v89 = vsel %vm65, %v61, 0
    %91 = vmatprep.subr.mxu0 0.0
    %92 = vmatpush1.msra.mxu0 0.0
    %93 = vmatprep.subr.mxu0 0.0
    %94 = vmatpush1.msra.mxu0 0.0
    %95 = vmatprep.subr.mxu0 0.0
    %96 = vmatpush1.msra.mxu0 0.0
    %97 = vmatprep.subr.mxu0 0.0
    %98 = vmatpush1.msra.mxu0 0.0
    %99 = vmatprep.subr.mxu0 0.0
    %100 = vmatpush1.msra.mxu0 0.0
    %101 = vmatprep.subr.mxu0 0.0
    %102 = vmatpush1.msra.mxu0 0.0
    %103 = vmatprep.subr.mxu0 0.0
    %104 = vmatpush1.msra.mxu0 0.0
    %105 = vmatprep.subr.mxu0 0.0
    %106 = vmatpush1.msra.mxu0 0.0
    %107 = vmatprep.subr.mxu0 0.0
    %108 = vmatpush1.msra.mxu0 0.0
    %109 = vmatprep.subr.mxu0 0.0
    %110 = vmatpush1.msra.mxu0 0.0
    %111 = vmatprep.subr.mxu0 0.0
    %112 = vmatpush1.msra.mxu0 0.0
    %113 = vmatprep.subr.mxu0 0.0
    %114 = vmatpush1.msra.mxu0 0.0
    %115 = vmatprep.subr.mxu0 0.0
    %116 = vmatpush1.msra.mxu0 0.0
    %117 = vmatprep.subr.mxu0 0.0
    %118 = vmatpush1.msra.mxu0 0.0
    %119 = vmatprep.subr.mxu0 0.0
    %120 = vmatpush1.msra.mxu0 %v89
    %121 = vmatprep.subr.mxu0 0.0
    %122 = vmatpush1.msra.mxu0 %v66
    %123 = vmatprep.subr.mxu0 0.0
    %124 = vmatpush2.msra.mxu0 0.0
    %125 = vmatprep.subr.mxu0 0.0
    %126 = vmatpush2.msra.mxu0 0.0
    %127 = vmatprep.subr.mxu0 0.0
    %128 = vmatpush2.msra.mxu0 0.0
    %129 = vmatprep.subr.mxu0 0.0
    %130 = vmatpush2.msra.mxu0 0.0
    %131 = vmatprep.subr.mxu0 0.0
    %132 = vmatpush2.msra.mxu0 0.0
    %133 = vmatprep.subr.mxu0 0.0
    %134 = vmatpush2.msra.mxu0 0.0
    %135 = vmatprep.subr.mxu0 0.0
    %136 = vmatpush2.msra.mxu0 0.0
    %137 = vmatprep.subr.mxu0 0.0
    %138 = vmatpush2.msra.mxu0 0.0
    %139 = vmatprep.subr.mxu0 0.0
    %140 = vmatpush2.msra.mxu0 0.0
    %141 = vmatprep.subr.mxu0 0.0
    %142 = vmatpush2.msra.mxu0 0.0
    %143 = vmatprep.subr.mxu0 0.0
    %144 = vmatpush2.msra.mxu0 0.0
    %145 = vmatprep.subr.mxu0 0.0
    %146 = vmatpush2.msra.mxu0 0.0
    %147 = vmatprep.subr.mxu0 0.0
    %148 = vmatpush2.msra.mxu0 0.0
    %149 = vmatprep.subr.mxu0 0.0
    %150 = vmatpush2.msra.mxu0 0.0
    %151 = vmatprep.subr.mxu0 0.0
    %152 = vmatpush2.msra.mxu0 0.0
    %153 = vmatprep.subr.mxu0 0.0
    %154 = vmatpush2.msra.mxu0 0.0
    %155 = vmatprep.mubr.f32.mxu0 0.0
    %156 = vmatmul.mubr.f32.gmra.mxu0 %v83
    %v157 = vpop.f32.mrf.mxu0
    %v158 = vadd.f32 %v74, %v157
    %v159 = vpop.f32.mrf.mxu0
    %160 = vmatprep.mubr.f32.mxu0 0.0
    %161 = vmatmul.mubr.f32.gmra.mxu0 %v86
    %v162 = vpop.f32.mrf.mxu0
    %v163 = vadd.f32 %v79, %v162
    %v164 = vpop.f32.mrf.mxu0
    %165 = vdwg.mxu0
    %v166 = vmax.f32 %v158, 0.0
    %v167 = vmax.f32 %v163, 0.0
    %168 = vrot.lane.b32.xlu0 %v166, 1
    %v169 = vpop.permute.xlu0 %168
    %170 = vrot.lane.b32.xlu0 %v167, 1
    %v171 = vpop.permute.xlu0 %170
    %v172 = vsel %vm55, %v169, 0.0
    %v173 = vsel %vm55, %v171, 0.0
    %174 = vrot.lane.b32.xlu0 %v166, 127
    %v175 = vpop.permute.xlu0 %174
    %176 = vrot.lane.b32.xlu0 %v167, 127
    %v177 = vpop.permute.xlu0 %176
    %v178 = vsel %vm60, %v175, 0.0
    %v179 = vsel %vm60, %v177, 0.0
    %v180 = vld [vmem:[%s3] sm:$0xff]
    %v181 = vld [vmem:[%s3 + $0x8] sm:$0xff]
    %v182 = vld [vmem:[%s3 + $0x10] sm:$0xff]
    %v183 = vld [vmem:[%s3 + $0x18] sm:$0xff]
    %v184 = vld [vmem:[%s4] sm:$0xff]
    %v185 = vld [vmem:[%s4 + $0x8] sm:$0xff]
    %v186 = vld [vmem:[%s4 + $0x10] sm:$0xff]
    %v187 = vld [vmem:[%s4 + $0x18] sm:$0xff]
    %189 = vset.pattern.permute.xlu0 0
    %190 = vperm.xlu0 %189, %v184
    %v191 = vpop.permute.xlu0 %190
    %194 = vset.pattern.permute.xlu0 0
    %195 = vperm.xlu0 %194, %v185
    %v196 = vpop.permute.xlu0 %195
    %199 = vset.pattern.permute.xlu0 0
    %200 = vperm.xlu0 %199, %v186
    %v201 = vpop.permute.xlu0 %200
    %204 = vset.pattern.permute.xlu0 0
    %205 = vperm.xlu0 %204, %v187
    %v206 = vpop.permute.xlu0 %205
    %vm208 = vcmask 392192
    %v210 = vsel %vm208, %v180, 0
    %v213 = vsel %vm208, %v181, 0
    %v216 = vsel %vm208, %v182, 0
    %v219 = vsel %vm208, %v183, 0
    %221 = vmatprep.subr.mxu0 0.0
    %222 = vmatpush1.msra.mxu0 0.0
    %223 = vmatprep.subr.mxu0 0.0
    %224 = vmatpush1.msra.mxu0 0.0
    %225 = vmatprep.subr.mxu0 0.0
    %226 = vmatpush1.msra.mxu0 0.0
    %227 = vmatprep.subr.mxu0 0.0
    %228 = vmatpush1.msra.mxu0 0.0
    %229 = vmatprep.subr.mxu0 0.0
    %230 = vmatpush1.msra.mxu0 0.0
    %231 = vmatprep.subr.mxu0 0.0
    %232 = vmatpush1.msra.mxu0 0.0
    %233 = vmatprep.subr.mxu0 0.0
    %234 = vmatpush1.msra.mxu0 0.0
    %235 = vmatprep.subr.mxu0 0.0
    %236 = vmatpush1.msra.mxu0 0.0
    %237 = vmatprep.subr.mxu0 0.0
    %238 = vmatpush1.msra.mxu0 0.0
    %239 = vmatprep.subr.mxu0 0.0
    %240 = vmatpush1.msra.mxu0 0.0
    %241 = vmatprep.subr.mxu0 0.0
    %242 = vmatpush1.msra.mxu0 %v179
    %243 = vmatprep.subr.mxu0 0.0
    %244 = vmatpush1.msra.mxu0 %v178
    %245 = vmatprep.subr.mxu0 0.0
    %246 = vmatpush1.msra.mxu0 %v167
    %247 = vmatprep.subr.mxu0 0.0
    %248 = vmatpush1.msra.mxu0 %v166
    %249 = vmatprep.subr.mxu0 0.0
    %250 = vmatpush1.msra.mxu0 %v173
    %251 = vmatprep.subr.mxu0 0.0
    %252 = vmatpush1.msra.mxu0 %v172
    %253 = vmatprep.subr.mxu0 0.0
    %254 = vmatpush2.msra.mxu0 0.0
    %255 = vmatprep.subr.mxu0 0.0
    %256 = vmatpush2.msra.mxu0 0.0
    %257 = vmatprep.subr.mxu0 0.0
    %258 = vmatpush2.msra.mxu0 0.0
    %259 = vmatprep.subr.mxu0 0.0
    %260 = vmatpush2.msra.mxu0 0.0
    %261 = vmatprep.subr.mxu0 0.0
    %262 = vmatpush2.msra.mxu0 0.0
    %263 = vmatprep.subr.mxu0 0.0
    %264 = vmatpush2.msra.mxu0 0.0
    %265 = vmatprep.subr.mxu0 0.0
    %266 = vmatpush2.msra.mxu0 0.0
    %267 = vmatprep.subr.mxu0 0.0
    %268 = vmatpush2.msra.mxu0 0.0
    %269 = vmatprep.subr.mxu0 0.0
    %270 = vmatpush2.msra.mxu0 0.0
    %271 = vmatprep.subr.mxu0 0.0
    %272 = vmatpush2.msra.mxu0 0.0
    %273 = vmatprep.subr.mxu0 0.0
    %274 = vmatpush2.msra.mxu0 0.0
    %275 = vmatprep.subr.mxu0 0.0
    %276 = vmatpush2.msra.mxu0 0.0
    %277 = vmatprep.subr.mxu0 0.0
    %278 = vmatpush2.msra.mxu0 0.0
    %279 = vmatprep.subr.mxu0 0.0
    %280 = vmatpush2.msra.mxu0 0.0
    %281 = vmatprep.subr.mxu0 0.0
    %282 = vmatpush2.msra.mxu0 0.0
    %283 = vmatprep.subr.mxu0 0.0
    %284 = vmatpush2.msra.mxu0 0.0
    %285 = vmatprep.mubr.f32.mxu0 0.0
    %286 = vmatmul.mubr.f32.gmra.mxu0 %v210
    %v287 = vpop.f32.mrf.mxu0
    %v288 = vadd.f32 %v191, %v287
    %v289 = vpop.f32.mrf.mxu0
    %290 = vmatprep.mubr.f32.mxu0 0.0
    %291 = vmatmul.mubr.f32.gmra.mxu0 %v213
    %v292 = vpop.f32.mrf.mxu0
    %v293 = vadd.f32 %v196, %v292
    %v294 = vpop.f32.mrf.mxu0
    %295 = vmatprep.mubr.f32.mxu0 0.0
    %296 = vmatmul.mubr.f32.gmra.mxu0 %v216
    %v297 = vpop.f32.mrf.mxu0
    %v298 = vadd.f32 %v201, %v297
    %v299 = vpop.f32.mrf.mxu0
    %300 = vmatprep.mubr.f32.mxu0 0.0
    %301 = vmatmul.mubr.f32.gmra.mxu0 %v219
    %v302 = vpop.f32.mrf.mxu0
    %v303 = vadd.f32 %v206, %v302
    %v304 = vpop.f32.mrf.mxu0
    %305 = vdwg.mxu0
    %v306 = vmax.f32 %v288, 0.0
    %v307 = vmax.f32 %v293, 0.0
    %v308 = vmax.f32 %v298, 0.0
    %v309 = vmax.f32 %v303, 0.0
    %314 = vrot.lane.b32.xlu0 %v306, 120
    %v315 = vpop.permute.xlu0 %314
    %316 = vrot.lane.b32.xlu0 %v307, 120
    %v317 = vpop.permute.xlu0 %316
    %318 = vrot.lane.b32.xlu0 %v308, 120
    %v319 = vpop.permute.xlu0 %318
    %320 = vrot.lane.b32.xlu0 %v309, 120
    %v321 = vpop.permute.xlu0 %320
    %326 = vrot.lane.b32.xlu0 %v306, 112
    %v327 = vpop.permute.xlu0 %326
    %328 = vrot.lane.b32.xlu0 %v307, 112
    %v329 = vpop.permute.xlu0 %328
    %330 = vrot.lane.b32.xlu0 %v308, 112
    %v331 = vpop.permute.xlu0 %330
    %332 = vrot.lane.b32.xlu0 %v309, 112
    %v333 = vpop.permute.xlu0 %332
    %338 = vrot.lane.b32.xlu0 %v306, 104
    %v339 = vpop.permute.xlu0 %338
    %340 = vrot.lane.b32.xlu0 %v307, 104
    %v341 = vpop.permute.xlu0 %340
    %342 = vrot.lane.b32.xlu0 %v308, 104
    %v343 = vpop.permute.xlu0 %342
    %344 = vrot.lane.b32.xlu0 %v309, 104
    %v345 = vpop.permute.xlu0 %344
    %350 = vrot.lane.b32.xlu0 %v306, 96
    %v351 = vpop.permute.xlu0 %350
    %352 = vrot.lane.b32.xlu0 %v307, 96
    %v353 = vpop.permute.xlu0 %352
    %354 = vrot.lane.b32.xlu0 %v308, 96
    %v355 = vpop.permute.xlu0 %354
    %356 = vrot.lane.b32.xlu0 %v309, 96
    %v357 = vpop.permute.xlu0 %356
    %362 = vrot.lane.b32.xlu0 %v306, 88
    %v363 = vpop.permute.xlu0 %362
    %364 = vrot.lane.b32.xlu0 %v307, 88
    %v365 = vpop.permute.xlu0 %364
    %366 = vrot.lane.b32.xlu0 %v308, 88
    %v367 = vpop.permute.xlu0 %366
    %368 = vrot.lane.b32.xlu0 %v309, 88
    %v369 = vpop.permute.xlu0 %368
    %374 = vrot.lane.b32.xlu0 %v306, 80
    %v375 = vpop.permute.xlu0 %374
    %376 = vrot.lane.b32.xlu0 %v307, 80
    %v377 = vpop.permute.xlu0 %376
    %378 = vrot.lane.b32.xlu0 %v308, 80
    %v379 = vpop.permute.xlu0 %378
    %380 = vrot.lane.b32.xlu0 %v309, 80
    %v381 = vpop.permute.xlu0 %380
    %386 = vrot.lane.b32.xlu0 %v306, 72
    %v387 = vpop.permute.xlu0 %386
    %388 = vrot.lane.b32.xlu0 %v307, 72
    %v389 = vpop.permute.xlu0 %388
    %390 = vrot.lane.b32.xlu0 %v308, 72
    %v391 = vpop.permute.xlu0 %390
    %392 = vrot.lane.b32.xlu0 %v309, 72
    %v393 = vpop.permute.xlu0 %392
    %398 = vrot.lane.b32.xlu0 %v306, 64
    %v399 = vpop.permute.xlu0 %398
    %400 = vrot.lane.b32.xlu0 %v307, 64
    %v401 = vpop.permute.xlu0 %400
    %402 = vrot.lane.b32.xlu0 %v308, 64
    %v403 = vpop.permute.xlu0 %402
    %404 = vrot.lane.b32.xlu0 %v309, 64
    %v405 = vpop.permute.xlu0 %404
    %410 = vrot.lane.b32.xlu0 %v306, 56
    %v411 = vpop.permute.xlu0 %410
    %412 = vrot.lane.b32.xlu0 %v307, 56
    %v413 = vpop.permute.xlu0 %412
    %414 = vrot.lane.b32.xlu0 %v308, 56
    %v415 = vpop.permute.xlu0 %414
    %416 = vrot.lane.b32.xlu0 %v309, 56
    %v417 = vpop.permute.xlu0 %416
    %422 = vrot.lane.b32.xlu0 %v306, 48
    %v423 = vpop.permute.xlu0 %422
    %424 = vrot.lane.b32.xlu0 %v307, 48
    %v425 = vpop.permute.xlu0 %424
    %426 = vrot.lane.b32.xlu0 %v308, 48
    %v427 = vpop.permute.xlu0 %426
    %428 = vrot.lane.b32.xlu0 %v309, 48
    %v429 = vpop.permute.xlu0 %428
    %434 = vrot.lane.b32.xlu0 %v306, 40
    %v435 = vpop.permute.xlu0 %434
    %436 = vrot.lane.b32.xlu0 %v307, 40
    %v437 = vpop.permute.xlu0 %436
    %438 = vrot.lane.b32.xlu0 %v308, 40
    %v439 = vpop.permute.xlu0 %438
    %440 = vrot.lane.b32.xlu0 %v309, 40
    %v441 = vpop.permute.xlu0 %440
    %446 = vrot.lane.b32.xlu0 %v306, 32
    %v447 = vpop.permute.xlu0 %446
    %448 = vrot.lane.b32.xlu0 %v307, 32
    %v449 = vpop.permute.xlu0 %448
    %450 = vrot.lane.b32.xlu0 %v308, 32
    %v451 = vpop.permute.xlu0 %450
    %452 = vrot.lane.b32.xlu0 %v309, 32
    %v453 = vpop.permute.xlu0 %452
    %458 = vrot.lane.b32.xlu0 %v306, 24
    %v459 = vpop.permute.xlu0 %458
    %460 = vrot.lane.b32.xlu0 %v307, 24
    %v461 = vpop.permute.xlu0 %460
    %462 = vrot.lane.b32.xlu0 %v308, 24
    %v463 = vpop.permute.xlu0 %462
    %464 = vrot.lane.b32.xlu0 %v309, 24
    %v465 = vpop.permute.xlu0 %464
    %470 = vrot.lane.b32.xlu0 %v306, 16
    %v471 = vpop.permute.xlu0 %470
    %472 = vrot.lane.b32.xlu0 %v307, 16
    %v473 = vpop.permute.xlu0 %472
    %474 = vrot.lane.b32.xlu0 %v308, 16
    %v475 = vpop.permute.xlu0 %474
    %476 = vrot.lane.b32.xlu0 %v309, 16
    %v477 = vpop.permute.xlu0 %476
    %482 = vrot.lane.b32.xlu0 %v306, 8
    %v483 = vpop.permute.xlu0 %482
    %484 = vrot.lane.b32.xlu0 %v307, 8
    %v485 = vpop.permute.xlu0 %484
    %486 = vrot.lane.b32.xlu0 %v308, 8
    %v487 = vpop.permute.xlu0 %486
    %488 = vrot.lane.b32.xlu0 %v309, 8
    %v489 = vpop.permute.xlu0 %488
    %v494 = vcombine.low %v306, %v327
    %v495 = vcombine.high %v306, %v327
    %v497 = vunpack.c.l.s4 1983009808
    %v498 = vunpack.c.0.s8 %v497
    %v499 = vlaneseq
    %v500 = vshrl.u32 %v499, 7
    %v501 = vsub.s32 %v498, %v500
    %v502 = vrot.slane %v494, %v501
    %v504 = vunpack.c.l.s4 1983009808
    %v505 = vunpack.c.0.s8 %v504
    %v506 = vlaneseq
    %v507 = vshrl.u32 %v506, 7
    %v508 = vsub.s32 %v505, %v507
    %v509 = vrot.slane %v495, %v508
    %v510 = vcombine.low %v315, %v339
    %v511 = vcombine.high %v315, %v339
    %v513 = vunpack.c.l.s4 1983009808
    %v514 = vunpack.c.0.s8 %v513
    %v515 = vlaneseq
    %v516 = vshrl.u32 %v515, 7
    %v517 = vsub.s32 %v514, %v516
    %v518 = vrot.slane %v510, %v517
    %v520 = vunpack.c.l.s4 1983009808
    %v521 = vunpack.c.0.s8 %v520
    %v522 = vlaneseq
    %v523 = vshrl.u32 %v522, 7
    %v524 = vsub.s32 %v521, %v523
    %v525 = vrot.slane %v511, %v524
    %v526 = vcombine.low %v351, %v375
    %v527 = vcombine.high %v351, %v375
    %v529 = vunpack.c.l.s4 1983009808
    %v530 = vunpack.c.0.s8 %v529
    %v531 = vlaneseq
    %v532 = vshrl.u32 %v531, 7
    %v533 = vsub.s32 %v530, %v532
    %v534 = vrot.slane %v526, %v533
    %v536 = vunpack.c.l.s4 1983009808
    %v537 = vunpack.c.0.s8 %v536
    %v538 = vlaneseq
    %v539 = vshrl.u32 %v538, 7
    %v540 = vsub.s32 %v537, %v539
    %v541 = vrot.slane %v527, %v540
    %v542 = vcombine.low %v363, %v387
    %v543 = vcombine.high %v363, %v387
    %v545 = vunpack.c.l.s4 1983009808
    %v546 = vunpack.c.0.s8 %v545
    %v547 = vlaneseq
    %v548 = vshrl.u32 %v547, 7
    %v549 = vsub.s32 %v546, %v548
    %v550 = vrot.slane %v542, %v549
    %v552 = vunpack.c.l.s4 1983009808
    %v553 = vunpack.c.0.s8 %v552
    %v554 = vlaneseq
    %v555 = vshrl.u32 %v554, 7
    %v556 = vsub.s32 %v553, %v555
    %v557 = vrot.slane %v543, %v556
    %v558 = vcombine.low %v502, %v518
    %v559 = vcombine.high %v502, %v518
    %v561 = vunpack.c.l.s4 1934713408
    %v562 = vunpack.c.0.s8 %v561
    %v563 = vlaneseq
    %v564 = vshrl.u32 %v563, 7
    %v565 = vsub.s32 %v562, %v564
    %v566 = vrot.slane %v558, %v565
    %v568 = vunpack.c.l.s4 1934713408
    %v569 = vunpack.c.0.s8 %v568
    %v570 = vlaneseq
    %v571 = vshrl.u32 %v570, 7
    %v572 = vsub.s32 %v569, %v571
    %v573 = vrot.slane %v559, %v572
    %v574 = vcombine.low %v509, %v525
    %v575 = vcombine.high %v509, %v525
    %v577 = vunpack.c.l.s4 1934713408
    %v578 = vunpack.c.0.s8 %v577
    %v579 = vlaneseq
    %v580 = vshrl.u32 %v579, 7
    %v581 = vsub.s32 %v578, %v580
    %v582 = vrot.slane %v574, %v581
    %v584 = vunpack.c.l.s4 1934713408
    %v585 = vunpack.c.0.s8 %v584
    %v586 = vlaneseq
    %v587 = vshrl.u32 %v586, 7
    %v588 = vsub.s32 %v585, %v587
    %v589 = vrot.slane %v575, %v588
    %v590 = vcombine.low %v534, %v550
    %v591 = vcombine.high %v534, %v550
    %v593 = vunpack.c.l.s4 1934713408
    %v594 = vunpack.c.0.s8 %v593
    %v595 = vlaneseq
    %v596 = vshrl.u32 %v595, 7
    %v597 = vsub.s32 %v594, %v596
    %v598 = vrot.slane %v590, %v597
    %v600 = vunpack.c.l.s4 1934713408
    %v601 = vunpack.c.0.s8 %v600
    %v602 = vlaneseq
    %v603 = vshrl.u32 %v602, 7
    %v604 = vsub.s32 %v601, %v603
    %v605 = vrot.slane %v591, %v604
    %v606 = vcombine.low %v541, %v557
    %v607 = vcombine.high %v541, %v557
    %v609 = vunpack.c.l.s4 1934713408
    %v610 = vunpack.c.0.s8 %v609
    %v611 = vlaneseq
    %v612 = vshrl.u32 %v611, 7
    %v613 = vsub.s32 %v610, %v612
    %v614 = vrot.slane %v606, %v613
    %v616 = vunpack.c.l.s4 1934713408
    %v617 = vunpack.c.0.s8 %v616
    %v618 = vlaneseq
    %v619 = vshrl.u32 %v618, 7
    %v620 = vsub.s32 %v617, %v619
    %v621 = vrot.slane %v607, %v620
    %v622 = vcombine.low %v566, %v598
    %v623 = vcombine.high %v566, %v598
    %v624 = vcombine.low %v573, %v605
    %v625 = vcombine.high %v573, %v605
    %v626 = vcombine.low %v582, %v614
    %v627 = vcombine.high %v582, %v614
    %v628 = vcombine.low %v589, %v621
    %v629 = vcombine.high %v589, %v621
    %v630 = vcombine.low %v399, %v423
    %v631 = vcombine.high %v399, %v423
    %v633 = vunpack.c.l.s4 1983009808
    %v634 = vunpack.c.0.s8 %v633
    %v635 = vlaneseq
    %v636 = vshrl.u32 %v635, 7
    %v637 = vsub.s32 %v634, %v636
    %v638 = vrot.slane %v630, %v637
    %v640 = vunpack.c.l.s4 1983009808
    %v641 = vunpack.c.0.s8 %v640
    %v642 = vlaneseq
    %v643 = vshrl.u32 %v642, 7
    %v644 = vsub.s32 %v641, %v643
    %v645 = vrot.slane %v631, %v644
    %v646 = vcombine.low %v411, %v435
    %v647 = vcombine.high %v411, %v435
    %v649 = vunpack.c.l.s4 1983009808
    %v650 = vunpack.c.0.s8 %v649
    %v651 = vlaneseq
    %v652 = vshrl.u32 %v651, 7
    %v653 = vsub.s32 %v650, %v652
    %v654 = vrot.slane %v646, %v653
    %v656 = vunpack.c.l.s4 1983009808
    %v657 = vunpack.c.0.s8 %v656
    %v658 = vlaneseq
    %v659 = vshrl.u32 %v658, 7
    %v660 = vsub.s32 %v657, %v659
    %v661 = vrot.slane %v647, %v660
    %v662 = vcombine.low %v447, %v471
    %v663 = vcombine.high %v447, %v471
    %v665 = vunpack.c.l.s4 1983009808
    %v666 = vunpack.c.0.s8 %v665
    %v667 = vlaneseq
    %v668 = vshrl.u32 %v667, 7
    %v669 = vsub.s32 %v666, %v668
    %v670 = vrot.slane %v662, %v669
    %v672 = vunpack.c.l.s4 1983009808
    %v673 = vunpack.c.0.s8 %v672
    %v674 = vlaneseq
    %v675 = vshrl.u32 %v674, 7
    %v676 = vsub.s32 %v673, %v675
    %v677 = vrot.slane %v663, %v676
    %v678 = vcombine.low %v459, %v483
    %v679 = vcombine.high %v459, %v483
    %v681 = vunpack.c.l.s4 1983009808
    %v682 = vunpack.c.0.s8 %v681
    %v683 = vlaneseq
    %v684 = vshrl.u32 %v683, 7
    %v685 = vsub.s32 %v682, %v684
    %v686 = vrot.slane %v678, %v685
    %v688 = vunpack.c.l.s4 1983009808
    %v689 = vunpack.c.0.s8 %v688
    %v690 = vlaneseq
    %v691 = vshrl.u32 %v690, 7
    %v692 = vsub.s32 %v689, %v691
    %v693 = vrot.slane %v679, %v692
    %v694 = vcombine.low %v638, %v654
    %v695 = vcombine.high %v638, %v654
    %v697 = vunpack.c.l.s4 1934713408
    %v698 = vunpack.c.0.s8 %v697
    %v699 = vlaneseq
    %v700 = vshrl.u32 %v699, 7
    %v701 = vsub.s32 %v698, %v700
    %v702 = vrot.slane %v694, %v701
    %v704 = vunpack.c.l.s4 1934713408
    %v705 = vunpack.c.0.s8 %v704
    %v706 = vlaneseq
    %v707 = vshrl.u32 %v706, 7
    %v708 = vsub.s32 %v705, %v707
    %v709 = vrot.slane %v695, %v708
    %v710 = vcombine.low %v645, %v661
    %v711 = vcombine.high %v645, %v661
    %v713 = vunpack.c.l.s4 1934713408
    %v714 = vunpack.c.0.s8 %v713
    %v715 = vlaneseq
    %v716 = vshrl.u32 %v715, 7
    %v717 = vsub.s32 %v714, %v716
    %v718 = vrot.slane %v710, %v717
    %v720 = vunpack.c.l.s4 1934713408
    %v721 = vunpack.c.0.s8 %v720
    %v722 = vlaneseq
    %v723 = vshrl.u32 %v722, 7
    %v724 = vsub.s32 %v721, %v723
    %v725 = vrot.slane %v711, %v724
    %v726 = vcombine.low %v670, %v686
    %v727 = vcombine.high %v670, %v686
    %v729 = vunpack.c.l.s4 1934713408
    %v730 = vunpack.c.0.s8 %v729
    %v731 = vlaneseq
    %v732 = vshrl.u32 %v731, 7
    %v733 = vsub.s32 %v730, %v732
    %v734 = vrot.slane %v726, %v733
    %v736 = vunpack.c.l.s4 1934713408
    %v737 = vunpack.c.0.s8 %v736
    %v738 = vlaneseq
    %v739 = vshrl.u32 %v738, 7
    %v740 = vsub.s32 %v737, %v739
    %v741 = vrot.slane %v727, %v740
    %v742 = vcombine.low %v677, %v693
    %v743 = vcombine.high %v677, %v693
    %v745 = vunpack.c.l.s4 1934713408
    %v746 = vunpack.c.0.s8 %v745
    %v747 = vlaneseq
    %v748 = vshrl.u32 %v747, 7
    %v749 = vsub.s32 %v746, %v748
    %v750 = vrot.slane %v742, %v749
    %v752 = vunpack.c.l.s4 1934713408
    %v753 = vunpack.c.0.s8 %v752
    %v754 = vlaneseq
    %v755 = vshrl.u32 %v754, 7
    %v756 = vsub.s32 %v753, %v755
    %v757 = vrot.slane %v743, %v756
    %v758 = vcombine.low %v702, %v734
    %v759 = vcombine.high %v702, %v734
    %v760 = vcombine.low %v709, %v741
    %v761 = vcombine.high %v709, %v741
    %v762 = vcombine.low %v718, %v750
    %v763 = vcombine.high %v718, %v750
    %v764 = vcombine.low %v725, %v757
    %v765 = vcombine.high %v725, %v757
    %v766 = vcombine.low %v307, %v329
    %v767 = vcombine.high %v307, %v329
    %v769 = vunpack.c.l.s4 1983009808
    %v770 = vunpack.c.0.s8 %v769
    %v771 = vlaneseq
    %v772 = vshrl.u32 %v771, 7
    %v773 = vsub.s32 %v770, %v772
    %v774 = vrot.slane %v766, %v773
    %v776 = vunpack.c.l.s4 1983009808
    %v777 = vunpack.c.0.s8 %v776
    %v778 = vlaneseq
    %v779 = vshrl.u32 %v778, 7
    %v780 = vsub.s32 %v777, %v779
    %v781 = vrot.slane %v767, %v780
    %v782 = vcombine.low %v317, %v341
    %v783 = vcombine.high %v317, %v341
    %v785 = vunpack.c.l.s4 1983009808
    %v786 = vunpack.c.0.s8 %v785
    %v787 = vlaneseq
    %v788 = vshrl.u32 %v787, 7
    %v789 = vsub.s32 %v786, %v788
    %v790 = vrot.slane %v782, %v789
    %v792 = vunpack.c.l.s4 1983009808
    %v793 = vunpack.c.0.s8 %v792
    %v794 = vlaneseq
    %v795 = vshrl.u32 %v794, 7
    %v796 = vsub.s32 %v793, %v795
    %v797 = vrot.slane %v783, %v796
    %v798 = vcombine.low %v353, %v377
    %v799 = vcombine.high %v353, %v377
    %v801 = vunpack.c.l.s4 1983009808
    %v802 = vunpack.c.0.s8 %v801
    %v803 = vlaneseq
    %v804 = vshrl.u32 %v803, 7
    %v805 = vsub.s32 %v802, %v804
    %v806 = vrot.slane %v798, %v805
    %v808 = vunpack.c.l.s4 1983009808
    %v809 = vunpack.c.0.s8 %v808
    %v810 = vlaneseq
    %v811 = vshrl.u32 %v810, 7
    %v812 = vsub.s32 %v809, %v811
    %v813 = vrot.slane %v799, %v812
    %v814 = vcombine.low %v365, %v389
    %v815 = vcombine.high %v365, %v389
    %v817 = vunpack.c.l.s4 1983009808
    %v818 = vunpack.c.0.s8 %v817
    %v819 = vlaneseq
    %v820 = vshrl.u32 %v819, 7
    %v821 = vsub.s32 %v818, %v820
    %v822 = vrot.slane %v814, %v821
    %v824 = vunpack.c.l.s4 1983009808
    %v825 = vunpack.c.0.s8 %v824
    %v826 = vlaneseq
    %v827 = vshrl.u32 %v826, 7
    %v828 = vsub.s32 %v825, %v827
    %v829 = vrot.slane %v815, %v828
    %v830 = vcombine.low %v774, %v790
    %v831 = vcombine.high %v774, %v790
    %v833 = vunpack.c.l.s4 1934713408
    %v834 = vunpack.c.0.s8 %v833
    %v835 = vlaneseq
    %v836 = vshrl.u32 %v835, 7
    %v837 = vsub.s32 %v834, %v836
    %v838 = vrot.slane %v830, %v837
    %v840 = vunpack.c.l.s4 1934713408
    %v841 = vunpack.c.0.s8 %v840
    %v842 = vlaneseq
    %v843 = vshrl.u32 %v842, 7
    %v844 = vsub.s32 %v841, %v843
    %v845 = vrot.slane %v831, %v844
    %v846 = vcombine.low %v781, %v797
    %v847 = vcombine.high %v781, %v797
    %v849 = vunpack.c.l.s4 1934713408
    %v850 = vunpack.c.0.s8 %v849
    %v851 = vlaneseq
    %v852 = vshrl.u32 %v851, 7
    %v853 = vsub.s32 %v850, %v852
    %v854 = vrot.slane %v846, %v853
    %v856 = vunpack.c.l.s4 1934713408
    %v857 = vunpack.c.0.s8 %v856
    %v858 = vlaneseq
    %v859 = vshrl.u32 %v858, 7
    %v860 = vsub.s32 %v857, %v859
    %v861 = vrot.slane %v847, %v860
    %v862 = vcombine.low %v806, %v822
    %v863 = vcombine.high %v806, %v822
    %v865 = vunpack.c.l.s4 1934713408
    %v866 = vunpack.c.0.s8 %v865
    %v867 = vlaneseq
    %v868 = vshrl.u32 %v867, 7
    %v869 = vsub.s32 %v866, %v868
    %v870 = vrot.slane %v862, %v869
    %v872 = vunpack.c.l.s4 1934713408
    %v873 = vunpack.c.0.s8 %v872
    %v874 = vlaneseq
    %v875 = vshrl.u32 %v874, 7
    %v876 = vsub.s32 %v873, %v875
    %v877 = vrot.slane %v863, %v876
    %v878 = vcombine.low %v813, %v829
    %v879 = vcombine.high %v813, %v829
    %v881 = vunpack.c.l.s4 1934713408
    %v882 = vunpack.c.0.s8 %v881
    %v883 = vlaneseq
    %v884 = vshrl.u32 %v883, 7
    %v885 = vsub.s32 %v882, %v884
    %v886 = vrot.slane %v878, %v885
    %v888 = vunpack.c.l.s4 1934713408
    %v889 = vunpack.c.0.s8 %v888
    %v890 = vlaneseq
    %v891 = vshrl.u32 %v890, 7
    %v892 = vsub.s32 %v889, %v891
    %v893 = vrot.slane %v879, %v892
    %v894 = vcombine.low %v838, %v870
    %v895 = vcombine.high %v838, %v870
    %v896 = vcombine.low %v845, %v877
    %v897 = vcombine.high %v845, %v877
    %v898 = vcombine.low %v854, %v886
    %v899 = vcombine.high %v854, %v886
    %v900 = vcombine.low %v861, %v893
    %v901 = vcombine.high %v861, %v893
    %v902 = vcombine.low %v401, %v425
    %v903 = vcombine.high %v401, %v425
    %v905 = vunpack.c.l.s4 1983009808
    %v906 = vunpack.c.0.s8 %v905
    %v907 = vlaneseq
    %v908 = vshrl.u32 %v907, 7
    %v909 = vsub.s32 %v906, %v908
    %v910 = vrot.slane %v902, %v909
    %v912 = vunpack.c.l.s4 1983009808
    %v913 = vunpack.c.0.s8 %v912
    %v914 = vlaneseq
    %v915 = vshrl.u32 %v914, 7
    %v916 = vsub.s32 %v913, %v915
    %v917 = vrot.slane %v903, %v916
    %v918 = vcombine.low %v413, %v437
    %v919 = vcombine.high %v413, %v437
    %v921 = vunpack.c.l.s4 1983009808
    %v922 = vunpack.c.0.s8 %v921
    %v923 = vlaneseq
    %v924 = vshrl.u32 %v923, 7
    %v925 = vsub.s32 %v922, %v924
    %v926 = vrot.slane %v918, %v925
    %v928 = vunpack.c.l.s4 1983009808
    %v929 = vunpack.c.0.s8 %v928
    %v930 = vlaneseq
    %v931 = vshrl.u32 %v930, 7
    %v932 = vsub.s32 %v929, %v931
    %v933 = vrot.slane %v919, %v932
    %v934 = vcombine.low %v449, %v473
    %v935 = vcombine.high %v449, %v473
    %v937 = vunpack.c.l.s4 1983009808
    %v938 = vunpack.c.0.s8 %v937
    %v939 = vlaneseq
    %v940 = vshrl.u32 %v939, 7
    %v941 = vsub.s32 %v938, %v940
    %v942 = vrot.slane %v934, %v941
    %v944 = vunpack.c.l.s4 1983009808
    %v945 = vunpack.c.0.s8 %v944
    %v946 = vlaneseq
    %v947 = vshrl.u32 %v946, 7
    %v948 = vsub.s32 %v945, %v947
    %v949 = vrot.slane %v935, %v948
    %v950 = vcombine.low %v461, %v485
    %v951 = vcombine.high %v461, %v485
    %v953 = vunpack.c.l.s4 1983009808
    %v954 = vunpack.c.0.s8 %v953
    %v955 = vlaneseq
    %v956 = vshrl.u32 %v955, 7
    %v957 = vsub.s32 %v954, %v956
    %v958 = vrot.slane %v950, %v957
    %v960 = vunpack.c.l.s4 1983009808
    %v961 = vunpack.c.0.s8 %v960
    %v962 = vlaneseq
    %v963 = vshrl.u32 %v962, 7
    %v964 = vsub.s32 %v961, %v963
    %v965 = vrot.slane %v951, %v964
    %v966 = vcombine.low %v910, %v926
    %v967 = vcombine.high %v910, %v926
    %v969 = vunpack.c.l.s4 1934713408
    %v970 = vunpack.c.0.s8 %v969
    %v971 = vlaneseq
    %v972 = vshrl.u32 %v971, 7
    %v973 = vsub.s32 %v970, %v972
    %v974 = vrot.slane %v966, %v973
    %v976 = vunpack.c.l.s4 1934713408
    %v977 = vunpack.c.0.s8 %v976
    %v978 = vlaneseq
    %v979 = vshrl.u32 %v978, 7
    %v980 = vsub.s32 %v977, %v979
    %v981 = vrot.slane %v967, %v980
    %v982 = vcombine.low %v917, %v933
    %v983 = vcombine.high %v917, %v933
    %v985 = vunpack.c.l.s4 1934713408
    %v986 = vunpack.c.0.s8 %v985
    %v987 = vlaneseq
    %v988 = vshrl.u32 %v987, 7
    %v989 = vsub.s32 %v986, %v988
    %v990 = vrot.slane %v982, %v989
    %v992 = vunpack.c.l.s4 1934713408
    %v993 = vunpack.c.0.s8 %v992
    %v994 = vlaneseq
    %v995 = vshrl.u32 %v994, 7
    %v996 = vsub.s32 %v993, %v995
    %v997 = vrot.slane %v983, %v996
    %v998 = vcombine.low %v942, %v958
    %v999 = vcombine.high %v942, %v958
    %v1001 = vunpack.c.l.s4 1934713408
    %v1002 = vunpack.c.0.s8 %v1001
    %v1003 = vlaneseq
    %v1004 = vshrl.u32 %v1003, 7
    %v1005 = vsub.s32 %v1002, %v1004
    %v1006 = vrot.slane %v998, %v1005
    %v1008 = vunpack.c.l.s4 1934713408
    %v1009 = vunpack.c.0.s8 %v1008
    %v1010 = vlaneseq
    %v1011 = vshrl.u32 %v1010, 7
    %v1012 = vsub.s32 %v1009, %v1011
    %v1013 = vrot.slane %v999, %v1012
    %v1014 = vcombine.low %v949, %v965
    %v1015 = vcombine.high %v949, %v965
    %v1017 = vunpack.c.l.s4 1934713408
    %v1018 = vunpack.c.0.s8 %v1017
    %v1019 = vlaneseq
    %v1020 = vshrl.u32 %v1019, 7
    %v1021 = vsub.s32 %v1018, %v1020
    %v1022 = vrot.slane %v1014, %v1021
    %v1024 = vunpack.c.l.s4 1934713408
    %v1025 = vunpack.c.0.s8 %v1024
    %v1026 = vlaneseq
    %v1027 = vshrl.u32 %v1026, 7
    %v1028 = vsub.s32 %v1025, %v1027
    %v1029 = vrot.slane %v1015, %v1028
    %v1030 = vcombine.low %v974, %v1006
    %v1031 = vcombine.high %v974, %v1006
    %v1032 = vcombine.low %v981, %v1013
    %v1033 = vcombine.high %v981, %v1013
    %v1034 = vcombine.low %v990, %v1022
    %v1035 = vcombine.high %v990, %v1022
    %v1036 = vcombine.low %v997, %v1029
    %v1037 = vcombine.high %v997, %v1029
    %v1038 = vcombine.low %v308, %v331
    %v1039 = vcombine.high %v308, %v331
    %v1041 = vunpack.c.l.s4 1983009808
    %v1042 = vunpack.c.0.s8 %v1041
    %v1043 = vlaneseq
    %v1044 = vshrl.u32 %v1043, 7
    %v1045 = vsub.s32 %v1042, %v1044
    %v1046 = vrot.slane %v1038, %v1045
    %v1048 = vunpack.c.l.s4 1983009808
    %v1049 = vunpack.c.0.s8 %v1048
    %v1050 = vlaneseq
    %v1051 = vshrl.u32 %v1050, 7
    %v1052 = vsub.s32 %v1049, %v1051
    %v1053 = vrot.slane %v1039, %v1052
    %v1054 = vcombine.low %v319, %v343
    %v1055 = vcombine.high %v319, %v343
    %v1057 = vunpack.c.l.s4 1983009808
    %v1058 = vunpack.c.0.s8 %v1057
    %v1059 = vlaneseq
    %v1060 = vshrl.u32 %v1059, 7
    %v1061 = vsub.s32 %v1058, %v1060
    %v1062 = vrot.slane %v1054, %v1061
    %v1064 = vunpack.c.l.s4 1983009808
    %v1065 = vunpack.c.0.s8 %v1064
    %v1066 = vlaneseq
    %v1067 = vshrl.u32 %v1066, 7
    %v1068 = vsub.s32 %v1065, %v1067
    %v1069 = vrot.slane %v1055, %v1068
    %v1070 = vcombine.low %v355, %v379
    %v1071 = vcombine.high %v355, %v379
    %v1073 = vunpack.c.l.s4 1983009808
    %v1074 = vunpack.c.0.s8 %v1073
    %v1075 = vlaneseq
    %v1076 = vshrl.u32 %v1075, 7
    %v1077 = vsub.s32 %v1074, %v1076
    %v1078 = vrot.slane %v1070, %v1077
    %v1080 = vunpack.c.l.s4 1983009808
    %v1081 = vunpack.c.0.s8 %v1080
    %v1082 = vlaneseq
    %v1083 = vshrl.u32 %v1082, 7
    %v1084 = vsub.s32 %v1081, %v1083
    %v1085 = vrot.slane %v1071, %v1084
    %v1086 = vcombine.low %v367, %v391
    %v1087 = vcombine.high %v367, %v391
    %v1089 = vunpack.c.l.s4 1983009808
    %v1090 = vunpack.c.0.s8 %v1089
    %v1091 = vlaneseq
    %v1092 = vshrl.u32 %v1091, 7
    %v1093 = vsub.s32 %v1090, %v1092
    %v1094 = vrot.slane %v1086, %v1093
    %v1096 = vunpack.c.l.s4 1983009808
    %v1097 = vunpack.c.0.s8 %v1096
    %v1098 = vlaneseq
    %v1099 = vshrl.u32 %v1098, 7
    %v1100 = vsub.s32 %v1097, %v1099
    %v1101 = vrot.slane %v1087, %v1100
    %v1102 = vcombine.low %v1046, %v1062
    %v1103 = vcombine.high %v1046, %v1062
    %v1105 = vunpack.c.l.s4 1934713408
    %v1106 = vunpack.c.0.s8 %v1105
    %v1107 = vlaneseq
    %v1108 = vshrl.u32 %v1107, 7
    %v1109 = vsub.s32 %v1106, %v1108
    %v1110 = vrot.slane %v1102, %v1109
    %v1112 = vunpack.c.l.s4 1934713408
    %v1113 = vunpack.c.0.s8 %v1112
    %v1114 = vlaneseq
    %v1115 = vshrl.u32 %v1114, 7
    %v1116 = vsub.s32 %v1113, %v1115
    %v1117 = vrot.slane %v1103, %v1116
    %v1118 = vcombine.low %v1053, %v1069
    %v1119 = vcombine.high %v1053, %v1069
    %v1121 = vunpack.c.l.s4 1934713408
    %v1122 = vunpack.c.0.s8 %v1121
    %v1123 = vlaneseq
    %v1124 = vshrl.u32 %v1123, 7
    %v1125 = vsub.s32 %v1122, %v1124
    %v1126 = vrot.slane %v1118, %v1125
    %v1128 = vunpack.c.l.s4 1934713408
    %v1129 = vunpack.c.0.s8 %v1128
    %v1130 = vlaneseq
    %v1131 = vshrl.u32 %v1130, 7
    %v1132 = vsub.s32 %v1129, %v1131
    %v1133 = vrot.slane %v1119, %v1132
    %v1134 = vcombine.low %v1078, %v1094
    %v1135 = vcombine.high %v1078, %v1094
    %v1137 = vunpack.c.l.s4 1934713408
    %v1138 = vunpack.c.0.s8 %v1137
    %v1139 = vlaneseq
    %v1140 = vshrl.u32 %v1139, 7
    %v1141 = vsub.s32 %v1138, %v1140
    %v1142 = vrot.slane %v1134, %v1141
    %v1144 = vunpack.c.l.s4 1934713408
    %v1145 = vunpack.c.0.s8 %v1144
    %v1146 = vlaneseq
    %v1147 = vshrl.u32 %v1146, 7
    %v1148 = vsub.s32 %v1145, %v1147
    %v1149 = vrot.slane %v1135, %v1148
    %v1150 = vcombine.low %v1085, %v1101
    %v1151 = vcombine.high %v1085, %v1101
    %v1153 = vunpack.c.l.s4 1934713408
    %v1154 = vunpack.c.0.s8 %v1153
    %v1155 = vlaneseq
    %v1156 = vshrl.u32 %v1155, 7
    %v1157 = vsub.s32 %v1154, %v1156
    %v1158 = vrot.slane %v1150, %v1157
    %v1160 = vunpack.c.l.s4 1934713408
    %v1161 = vunpack.c.0.s8 %v1160
    %v1162 = vlaneseq
    %v1163 = vshrl.u32 %v1162, 7
    %v1164 = vsub.s32 %v1161, %v1163
    %v1165 = vrot.slane %v1151, %v1164
    %v1166 = vcombine.low %v1110, %v1142
    %v1167 = vcombine.high %v1110, %v1142
    %v1168 = vcombine.low %v1117, %v1149
    %v1169 = vcombine.high %v1117, %v1149
    %v1170 = vcombine.low %v1126, %v1158
    %v1171 = vcombine.high %v1126, %v1158
    %v1172 = vcombine.low %v1133, %v1165
    %v1173 = vcombine.high %v1133, %v1165
    %v1174 = vcombine.low %v403, %v427
    %v1175 = vcombine.high %v403, %v427
    %v1177 = vunpack.c.l.s4 1983009808
    %v1178 = vunpack.c.0.s8 %v1177
    %v1179 = vlaneseq
    %v1180 = vshrl.u32 %v1179, 7
    %v1181 = vsub.s32 %v1178, %v1180
    %v1182 = vrot.slane %v1174, %v1181
    %v1184 = vunpack.c.l.s4 1983009808
    %v1185 = vunpack.c.0.s8 %v1184
    %v1186 = vlaneseq
    %v1187 = vshrl.u32 %v1186, 7
    %v1188 = vsub.s32 %v1185, %v1187
    %v1189 = vrot.slane %v1175, %v1188
    %v1190 = vcombine.low %v415, %v439
    %v1191 = vcombine.high %v415, %v439
    %v1193 = vunpack.c.l.s4 1983009808
    %v1194 = vunpack.c.0.s8 %v1193
    %v1195 = vlaneseq
    %v1196 = vshrl.u32 %v1195, 7
    %v1197 = vsub.s32 %v1194, %v1196
    %v1198 = vrot.slane %v1190, %v1197
    %v1200 = vunpack.c.l.s4 1983009808
    %v1201 = vunpack.c.0.s8 %v1200
    %v1202 = vlaneseq
    %v1203 = vshrl.u32 %v1202, 7
    %v1204 = vsub.s32 %v1201, %v1203
    %v1205 = vrot.slane %v1191, %v1204
    %v1206 = vcombine.low %v451, %v475
    %v1207 = vcombine.high %v451, %v475
    %v1209 = vunpack.c.l.s4 1983009808
    %v1210 = vunpack.c.0.s8 %v1209
    %v1211 = vlaneseq
    %v1212 = vshrl.u32 %v1211, 7
    %v1213 = vsub.s32 %v1210, %v1212
    %v1214 = vrot.slane %v1206, %v1213
    %v1216 = vunpack.c.l.s4 1983009808
    %v1217 = vunpack.c.0.s8 %v1216
    %v1218 = vlaneseq
    %v1219 = vshrl.u32 %v1218, 7
    %v1220 = vsub.s32 %v1217, %v1219
    %v1221 = vrot.slane %v1207, %v1220
    %v1222 = vcombine.low %v463, %v487
    %v1223 = vcombine.high %v463, %v487
    %v1225 = vunpack.c.l.s4 1983009808
    %v1226 = vunpack.c.0.s8 %v1225
    %v1227 = vlaneseq
    %v1228 = vshrl.u32 %v1227, 7
    %v1229 = vsub.s32 %v1226, %v1228
    %v1230 = vrot.slane %v1222, %v1229
    %v1232 = vunpack.c.l.s4 1983009808
    %v1233 = vunpack.c.0.s8 %v1232
    %v1234 = vlaneseq
    %v1235 = vshrl.u32 %v1234, 7
    %v1236 = vsub.s32 %v1233, %v1235
    %v1237 = vrot.slane %v1223, %v1236
    %v1238 = vcombine.low %v1182, %v1198
    %v1239 = vcombine.high %v1182, %v1198
    %v1241 = vunpack.c.l.s4 1934713408
    %v1242 = vunpack.c.0.s8 %v1241
    %v1243 = vlaneseq
    %v1244 = vshrl.u32 %v1243, 7
    %v1245 = vsub.s32 %v1242, %v1244
    %v1246 = vrot.slane %v1238, %v1245
    %v1248 = vunpack.c.l.s4 1934713408
    %v1249 = vunpack.c.0.s8 %v1248
    %v1250 = vlaneseq
    %v1251 = vshrl.u32 %v1250, 7
    %v1252 = vsub.s32 %v1249, %v1251
    %v1253 = vrot.slane %v1239, %v1252
    %v1254 = vcombine.low %v1189, %v1205
    %v1255 = vcombine.high %v1189, %v1205
    %v1257 = vunpack.c.l.s4 1934713408
    %v1258 = vunpack.c.0.s8 %v1257
    %v1259 = vlaneseq
    %v1260 = vshrl.u32 %v1259, 7
    %v1261 = vsub.s32 %v1258, %v1260
    %v1262 = vrot.slane %v1254, %v1261
    %v1264 = vunpack.c.l.s4 1934713408
    %v1265 = vunpack.c.0.s8 %v1264
    %v1266 = vlaneseq
    %v1267 = vshrl.u32 %v1266, 7
    %v1268 = vsub.s32 %v1265, %v1267
    %v1269 = vrot.slane %v1255, %v1268
    %v1270 = vcombine.low %v1214, %v1230
    %v1271 = vcombine.high %v1214, %v1230
    %v1273 = vunpack.c.l.s4 1934713408
    %v1274 = vunpack.c.0.s8 %v1273
    %v1275 = vlaneseq
    %v1276 = vshrl.u32 %v1275, 7
    %v1277 = vsub.s32 %v1274, %v1276
    %v1278 = vrot.slane %v1270, %v1277
    %v1280 = vunpack.c.l.s4 1934713408
    %v1281 = vunpack.c.0.s8 %v1280
    %v1282 = vlaneseq
    %v1283 = vshrl.u32 %v1282, 7
    %v1284 = vsub.s32 %v1281, %v1283
    %v1285 = vrot.slane %v1271, %v1284
    %v1286 = vcombine.low %v1221, %v1237
    %v1287 = vcombine.high %v1221, %v1237
    %v1289 = vunpack.c.l.s4 1934713408
    %v1290 = vunpack.c.0.s8 %v1289
    %v1291 = vlaneseq
    %v1292 = vshrl.u32 %v1291, 7
    %v1293 = vsub.s32 %v1290, %v1292
    %v1294 = vrot.slane %v1286, %v1293
    %v1296 = vunpack.c.l.s4 1934713408
    %v1297 = vunpack.c.0.s8 %v1296
    %v1298 = vlaneseq
    %v1299 = vshrl.u32 %v1298, 7
    %v1300 = vsub.s32 %v1297, %v1299
    %v1301 = vrot.slane %v1287, %v1300
    %v1302 = vcombine.low %v1246, %v1278
    %v1303 = vcombine.high %v1246, %v1278
    %v1304 = vcombine.low %v1253, %v1285
    %v1305 = vcombine.high %v1253, %v1285
    %v1306 = vcombine.low %v1262, %v1294
    %v1307 = vcombine.high %v1262, %v1294
    %v1308 = vcombine.low %v1269, %v1301
    %v1309 = vcombine.high %v1269, %v1301
    %v1310 = vcombine.low %v309, %v333
    %v1311 = vcombine.high %v309, %v333
    %v1313 = vunpack.c.l.s4 1983009808
    %v1314 = vunpack.c.0.s8 %v1313
    %v1315 = vlaneseq
    %v1316 = vshrl.u32 %v1315, 7
    %v1317 = vsub.s32 %v1314, %v1316
    %v1318 = vrot.slane %v1310, %v1317
    %v1320 = vunpack.c.l.s4 1983009808
    %v1321 = vunpack.c.0.s8 %v1320
    %v1322 = vlaneseq
    %v1323 = vshrl.u32 %v1322, 7
    %v1324 = vsub.s32 %v1321, %v1323
    %v1325 = vrot.slane %v1311, %v1324
    %v1326 = vcombine.low %v321, %v345
    %v1327 = vcombine.high %v321, %v345
    %v1329 = vunpack.c.l.s4 1983009808
    %v1330 = vunpack.c.0.s8 %v1329
    %v1331 = vlaneseq
    %v1332 = vshrl.u32 %v1331, 7
    %v1333 = vsub.s32 %v1330, %v1332
    %v1334 = vrot.slane %v1326, %v1333
    %v1336 = vunpack.c.l.s4 1983009808
    %v1337 = vunpack.c.0.s8 %v1336
    %v1338 = vlaneseq
    %v1339 = vshrl.u32 %v1338, 7
    %v1340 = vsub.s32 %v1337, %v1339
    %v1341 = vrot.slane %v1327, %v1340
    %v1342 = vcombine.low %v357, %v381
    %v1343 = vcombine.high %v357, %v381
    %v1345 = vunpack.c.l.s4 1983009808
    %v1346 = vunpack.c.0.s8 %v1345
    %v1347 = vlaneseq
    %v1348 = vshrl.u32 %v1347, 7
    %v1349 = vsub.s32 %v1346, %v1348
    %v1350 = vrot.slane %v1342, %v1349
    %v1352 = vunpack.c.l.s4 1983009808
    %v1353 = vunpack.c.0.s8 %v1352
    %v1354 = vlaneseq
    %v1355 = vshrl.u32 %v1354, 7
    %v1356 = vsub.s32 %v1353, %v1355
    %v1357 = vrot.slane %v1343, %v1356
    %v1358 = vcombine.low %v369, %v393
    %v1359 = vcombine.high %v369, %v393
    %v1361 = vunpack.c.l.s4 1983009808
    %v1362 = vunpack.c.0.s8 %v1361
    %v1363 = vlaneseq
    %v1364 = vshrl.u32 %v1363, 7
    %v1365 = vsub.s32 %v1362, %v1364
    %v1366 = vrot.slane %v1358, %v1365
    %v1368 = vunpack.c.l.s4 1983009808
    %v1369 = vunpack.c.0.s8 %v1368
    %v1370 = vlaneseq
    %v1371 = vshrl.u32 %v1370, 7
    %v1372 = vsub.s32 %v1369, %v1371
    %v1373 = vrot.slane %v1359, %v1372
    %v1374 = vcombine.low %v1318, %v1334
    %v1375 = vcombine.high %v1318, %v1334
    %v1377 = vunpack.c.l.s4 1934713408
    %v1378 = vunpack.c.0.s8 %v1377
    %v1379 = vlaneseq
    %v1380 = vshrl.u32 %v1379, 7
    %v1381 = vsub.s32 %v1378, %v1380
    %v1382 = vrot.slane %v1374, %v1381
    %v1384 = vunpack.c.l.s4 1934713408
    %v1385 = vunpack.c.0.s8 %v1384
    %v1386 = vlaneseq
    %v1387 = vshrl.u32 %v1386, 7
    %v1388 = vsub.s32 %v1385, %v1387
    %v1389 = vrot.slane %v1375, %v1388
    %v1390 = vcombine.low %v1325, %v1341
    %v1391 = vcombine.high %v1325, %v1341
    %v1393 = vunpack.c.l.s4 1934713408
    %v1394 = vunpack.c.0.s8 %v1393
    %v1395 = vlaneseq
    %v1396 = vshrl.u32 %v1395, 7
    %v1397 = vsub.s32 %v1394, %v1396
    %v1398 = vrot.slane %v1390, %v1397
    %v1400 = vunpack.c.l.s4 1934713408
    %v1401 = vunpack.c.0.s8 %v1400
    %v1402 = vlaneseq
    %v1403 = vshrl.u32 %v1402, 7
    %v1404 = vsub.s32 %v1401, %v1403
    %v1405 = vrot.slane %v1391, %v1404
    %v1406 = vcombine.low %v1350, %v1366
    %v1407 = vcombine.high %v1350, %v1366
    %v1409 = vunpack.c.l.s4 1934713408
    %v1410 = vunpack.c.0.s8 %v1409
    %v1411 = vlaneseq
    %v1412 = vshrl.u32 %v1411, 7
    %v1413 = vsub.s32 %v1410, %v1412
    %v1414 = vrot.slane %v1406, %v1413
    %v1416 = vunpack.c.l.s4 1934713408
    %v1417 = vunpack.c.0.s8 %v1416
    %v1418 = vlaneseq
    %v1419 = vshrl.u32 %v1418, 7
    %v1420 = vsub.s32 %v1417, %v1419
    %v1421 = vrot.slane %v1407, %v1420
    %v1422 = vcombine.low %v1357, %v1373
    %v1423 = vcombine.high %v1357, %v1373
    %v1425 = vunpack.c.l.s4 1934713408
    %v1426 = vunpack.c.0.s8 %v1425
    %v1427 = vlaneseq
    %v1428 = vshrl.u32 %v1427, 7
    %v1429 = vsub.s32 %v1426, %v1428
    %v1430 = vrot.slane %v1422, %v1429
    %v1432 = vunpack.c.l.s4 1934713408
    %v1433 = vunpack.c.0.s8 %v1432
    %v1434 = vlaneseq
    %v1435 = vshrl.u32 %v1434, 7
    %v1436 = vsub.s32 %v1433, %v1435
    %v1437 = vrot.slane %v1423, %v1436
    %v1438 = vcombine.low %v1382, %v1414
    %v1439 = vcombine.high %v1382, %v1414
    %v1440 = vcombine.low %v1389, %v1421
    %v1441 = vcombine.high %v1389, %v1421
    %v1442 = vcombine.low %v1398, %v1430
    %v1443 = vcombine.high %v1398, %v1430
    %v1444 = vcombine.low %v1405, %v1437
    %v1445 = vcombine.high %v1405, %v1437
    %v1446 = vcombine.low %v405, %v429
    %v1447 = vcombine.high %v405, %v429
    %v1449 = vunpack.c.l.s4 1983009808
    %v1450 = vunpack.c.0.s8 %v1449
    %v1451 = vlaneseq
    %v1452 = vshrl.u32 %v1451, 7
    %v1453 = vsub.s32 %v1450, %v1452
    %v1454 = vrot.slane %v1446, %v1453
    %v1456 = vunpack.c.l.s4 1983009808
    %v1457 = vunpack.c.0.s8 %v1456
    %v1458 = vlaneseq
    %v1459 = vshrl.u32 %v1458, 7
    %v1460 = vsub.s32 %v1457, %v1459
    %v1461 = vrot.slane %v1447, %v1460
    %v1462 = vcombine.low %v417, %v441
    %v1463 = vcombine.high %v417, %v441
    %v1465 = vunpack.c.l.s4 1983009808
    %v1466 = vunpack.c.0.s8 %v1465
    %v1467 = vlaneseq
    %v1468 = vshrl.u32 %v1467, 7
    %v1469 = vsub.s32 %v1466, %v1468
    %v1470 = vrot.slane %v1462, %v1469
    %v1472 = vunpack.c.l.s4 1983009808
    %v1473 = vunpack.c.0.s8 %v1472
    %v1474 = vlaneseq
    %v1475 = vshrl.u32 %v1474, 7
    %v1476 = vsub.s32 %v1473, %v1475
    %v1477 = vrot.slane %v1463, %v1476
    %v1478 = vcombine.low %v453, %v477
    %v1479 = vcombine.high %v453, %v477
    %v1481 = vunpack.c.l.s4 1983009808
    %v1482 = vunpack.c.0.s8 %v1481
    %v1483 = vlaneseq
    %v1484 = vshrl.u32 %v1483, 7
    %v1485 = vsub.s32 %v1482, %v1484
    %v1486 = vrot.slane %v1478, %v1485
    %v1488 = vunpack.c.l.s4 1983009808
    %v1489 = vunpack.c.0.s8 %v1488
    %v1490 = vlaneseq
    %v1491 = vshrl.u32 %v1490, 7
    %v1492 = vsub.s32 %v1489, %v1491
    %v1493 = vrot.slane %v1479, %v1492
    %v1494 = vcombine.low %v465, %v489
    %v1495 = vcombine.high %v465, %v489
    %v1497 = vunpack.c.l.s4 1983009808
    %v1498 = vunpack.c.0.s8 %v1497
    %v1499 = vlaneseq
    %v1500 = vshrl.u32 %v1499, 7
    %v1501 = vsub.s32 %v1498, %v1500
    %v1502 = vrot.slane %v1494, %v1501
    %v1504 = vunpack.c.l.s4 1983009808
    %v1505 = vunpack.c.0.s8 %v1504
    %v1506 = vlaneseq
    %v1507 = vshrl.u32 %v1506, 7
    %v1508 = vsub.s32 %v1505, %v1507
    %v1509 = vrot.slane %v1495, %v1508
    %v1510 = vcombine.low %v1454, %v1470
    %v1511 = vcombine.high %v1454, %v1470
    %v1513 = vunpack.c.l.s4 1934713408
    %v1514 = vunpack.c.0.s8 %v1513
    %v1515 = vlaneseq
    %v1516 = vshrl.u32 %v1515, 7
    %v1517 = vsub.s32 %v1514, %v1516
    %v1518 = vrot.slane %v1510, %v1517
    %v1520 = vunpack.c.l.s4 1934713408
    %v1521 = vunpack.c.0.s8 %v1520
    %v1522 = vlaneseq
    %v1523 = vshrl.u32 %v1522, 7
    %v1524 = vsub.s32 %v1521, %v1523
    %v1525 = vrot.slane %v1511, %v1524
    %v1526 = vcombine.low %v1461, %v1477
    %v1527 = vcombine.high %v1461, %v1477
    %v1529 = vunpack.c.l.s4 1934713408
    %v1530 = vunpack.c.0.s8 %v1529
    %v1531 = vlaneseq
    %v1532 = vshrl.u32 %v1531, 7
    %v1533 = vsub.s32 %v1530, %v1532
    %v1534 = vrot.slane %v1526, %v1533
    %v1536 = vunpack.c.l.s4 1934713408
    %v1537 = vunpack.c.0.s8 %v1536
    %v1538 = vlaneseq
    %v1539 = vshrl.u32 %v1538, 7
    %v1540 = vsub.s32 %v1537, %v1539
    %v1541 = vrot.slane %v1527, %v1540
    %v1542 = vcombine.low %v1486, %v1502
    %v1543 = vcombine.high %v1486, %v1502
    %v1545 = vunpack.c.l.s4 1934713408
    %v1546 = vunpack.c.0.s8 %v1545
    %v1547 = vlaneseq
    %v1548 = vshrl.u32 %v1547, 7
    %v1549 = vsub.s32 %v1546, %v1548
    %v1550 = vrot.slane %v1542, %v1549
    %v1552 = vunpack.c.l.s4 1934713408
    %v1553 = vunpack.c.0.s8 %v1552
    %v1554 = vlaneseq
    %v1555 = vshrl.u32 %v1554, 7
    %v1556 = vsub.s32 %v1553, %v1555
    %v1557 = vrot.slane %v1543, %v1556
    %v1558 = vcombine.low %v1493, %v1509
    %v1559 = vcombine.high %v1493, %v1509
    %v1561 = vunpack.c.l.s4 1934713408
    %v1562 = vunpack.c.0.s8 %v1561
    %v1563 = vlaneseq
    %v1564 = vshrl.u32 %v1563, 7
    %v1565 = vsub.s32 %v1562, %v1564
    %v1566 = vrot.slane %v1558, %v1565
    %v1568 = vunpack.c.l.s4 1934713408
    %v1569 = vunpack.c.0.s8 %v1568
    %v1570 = vlaneseq
    %v1571 = vshrl.u32 %v1570, 7
    %v1572 = vsub.s32 %v1569, %v1571
    %v1573 = vrot.slane %v1559, %v1572
    %v1574 = vcombine.low %v1518, %v1550
    %v1575 = vcombine.high %v1518, %v1550
    %v1576 = vcombine.low %v1525, %v1557
    %v1577 = vcombine.high %v1525, %v1557
    %v1578 = vcombine.low %v1534, %v1566
    %v1579 = vcombine.high %v1534, %v1566
    %v1580 = vcombine.low %v1541, %v1573
    %v1581 = vcombine.high %v1541, %v1573
    %vm1582 = vcmask 64512
    %v1583 = vsel %vm1582, %v622, 0.0
    %1584 = vadd.xlane.f32.xlu0 %v1583
    %v1585 = vpop.xlane.xlu0 %1584
    %v1586 = vsel %vm1582, %v758, 0.0
    %1587 = vadd.xlane.f32.xlu0 %v1586
    %v1588 = vpop.xlane.xlu0 %1587
    %v1589 = vsel %vm1582, %v623, 0.0
    %1590 = vadd.xlane.f32.xlu0 %v1589
    %v1591 = vpop.xlane.xlu0 %1590
    %v1592 = vsel %vm1582, %v759, 0.0
    %1593 = vadd.xlane.f32.xlu0 %v1592
    %v1594 = vpop.xlane.xlu0 %1593
    %v1595 = vsel %vm1582, %v624, 0.0
    %1596 = vadd.xlane.f32.xlu0 %v1595
    %v1597 = vpop.xlane.xlu0 %1596
    %v1598 = vsel %vm1582, %v760, 0.0
    %1599 = vadd.xlane.f32.xlu0 %v1598
    %v1600 = vpop.xlane.xlu0 %1599
    %v1601 = vsel %vm1582, %v625, 0.0
    %1602 = vadd.xlane.f32.xlu0 %v1601
    %v1603 = vpop.xlane.xlu0 %1602
    %v1604 = vsel %vm1582, %v761, 0.0
    %1605 = vadd.xlane.f32.xlu0 %v1604
    %v1606 = vpop.xlane.xlu0 %1605
    %v1607 = vsel %vm1582, %v626, 0.0
    %1608 = vadd.xlane.f32.xlu0 %v1607
    %v1609 = vpop.xlane.xlu0 %1608
    %v1610 = vsel %vm1582, %v762, 0.0
    %1611 = vadd.xlane.f32.xlu0 %v1610
    %v1612 = vpop.xlane.xlu0 %1611
    %v1613 = vsel %vm1582, %v627, 0.0
    %1614 = vadd.xlane.f32.xlu0 %v1613
    %v1615 = vpop.xlane.xlu0 %1614
    %v1616 = vsel %vm1582, %v763, 0.0
    %1617 = vadd.xlane.f32.xlu0 %v1616
    %v1618 = vpop.xlane.xlu0 %1617
    %v1619 = vsel %vm1582, %v628, 0.0
    %1620 = vadd.xlane.f32.xlu0 %v1619
    %v1621 = vpop.xlane.xlu0 %1620
    %v1622 = vsel %vm1582, %v764, 0.0
    %1623 = vadd.xlane.f32.xlu0 %v1622
    %v1624 = vpop.xlane.xlu0 %1623
    %v1625 = vsel %vm1582, %v629, 0.0
    %1626 = vadd.xlane.f32.xlu0 %v1625
    %v1627 = vpop.xlane.xlu0 %1626
    %v1628 = vsel %vm1582, %v765, 0.0
    %1629 = vadd.xlane.f32.xlu0 %v1628
    %v1630 = vpop.xlane.xlu0 %1629
    %v1631 = vsel %vm1582, %v894, 0.0
    %1632 = vadd.xlane.f32.xlu0 %v1631
    %v1633 = vpop.xlane.xlu0 %1632
    %v1634 = vsel %vm1582, %v1030, 0.0
    %1635 = vadd.xlane.f32.xlu0 %v1634
    %v1636 = vpop.xlane.xlu0 %1635
    %v1637 = vsel %vm1582, %v895, 0.0
    %1638 = vadd.xlane.f32.xlu0 %v1637
    %v1639 = vpop.xlane.xlu0 %1638
    %v1640 = vsel %vm1582, %v1031, 0.0
    %1641 = vadd.xlane.f32.xlu0 %v1640
    %v1642 = vpop.xlane.xlu0 %1641
    %v1643 = vsel %vm1582, %v896, 0.0
    %1644 = vadd.xlane.f32.xlu0 %v1643
    %v1645 = vpop.xlane.xlu0 %1644
    %v1646 = vsel %vm1582, %v1032, 0.0
    %1647 = vadd.xlane.f32.xlu0 %v1646
    %v1648 = vpop.xlane.xlu0 %1647
    %v1649 = vsel %vm1582, %v897, 0.0
    %1650 = vadd.xlane.f32.xlu0 %v1649
    %v1651 = vpop.xlane.xlu0 %1650
    %v1652 = vsel %vm1582, %v1033, 0.0
    %1653 = vadd.xlane.f32.xlu0 %v1652
    %v1654 = vpop.xlane.xlu0 %1653
    %v1655 = vsel %vm1582, %v898, 0.0
    %1656 = vadd.xlane.f32.xlu0 %v1655
    %v1657 = vpop.xlane.xlu0 %1656
    %v1658 = vsel %vm1582, %v1034, 0.0
    %1659 = vadd.xlane.f32.xlu0 %v1658
    %v1660 = vpop.xlane.xlu0 %1659
    %v1661 = vsel %vm1582, %v899, 0.0
    %1662 = vadd.xlane.f32.xlu0 %v1661
    %v1663 = vpop.xlane.xlu0 %1662
    %v1664 = vsel %vm1582, %v1035, 0.0
    %1665 = vadd.xlane.f32.xlu0 %v1664
    %v1666 = vpop.xlane.xlu0 %1665
    %v1667 = vsel %vm1582, %v900, 0.0
    %1668 = vadd.xlane.f32.xlu0 %v1667
    %v1669 = vpop.xlane.xlu0 %1668
    %v1670 = vsel %vm1582, %v1036, 0.0
    %1671 = vadd.xlane.f32.xlu0 %v1670
    %v1672 = vpop.xlane.xlu0 %1671
    %v1673 = vsel %vm1582, %v901, 0.0
    %1674 = vadd.xlane.f32.xlu0 %v1673
    %v1675 = vpop.xlane.xlu0 %1674
    %v1676 = vsel %vm1582, %v1037, 0.0
    %1677 = vadd.xlane.f32.xlu0 %v1676
    %v1678 = vpop.xlane.xlu0 %1677
    %v1679 = vsel %vm1582, %v1166, 0.0
    %1680 = vadd.xlane.f32.xlu0 %v1679
    %v1681 = vpop.xlane.xlu0 %1680
    %v1682 = vsel %vm1582, %v1302, 0.0
    %1683 = vadd.xlane.f32.xlu0 %v1682
    %v1684 = vpop.xlane.xlu0 %1683
    %v1685 = vsel %vm1582, %v1167, 0.0
    %1686 = vadd.xlane.f32.xlu0 %v1685
    %v1687 = vpop.xlane.xlu0 %1686
    %v1688 = vsel %vm1582, %v1303, 0.0
    %1689 = vadd.xlane.f32.xlu0 %v1688
    %v1690 = vpop.xlane.xlu0 %1689
    %v1691 = vsel %vm1582, %v1168, 0.0
    %1692 = vadd.xlane.f32.xlu0 %v1691
    %v1693 = vpop.xlane.xlu0 %1692
    %v1694 = vsel %vm1582, %v1304, 0.0
    %1695 = vadd.xlane.f32.xlu0 %v1694
    %v1696 = vpop.xlane.xlu0 %1695
    %v1697 = vsel %vm1582, %v1169, 0.0
    %1698 = vadd.xlane.f32.xlu0 %v1697
    %v1699 = vpop.xlane.xlu0 %1698
    %v1700 = vsel %vm1582, %v1305, 0.0
    %1701 = vadd.xlane.f32.xlu0 %v1700
    %v1702 = vpop.xlane.xlu0 %1701
    %v1703 = vsel %vm1582, %v1170, 0.0
    %1704 = vadd.xlane.f32.xlu0 %v1703
    %v1705 = vpop.xlane.xlu0 %1704
    %v1706 = vsel %vm1582, %v1306, 0.0
    %1707 = vadd.xlane.f32.xlu0 %v1706
    %v1708 = vpop.xlane.xlu0 %1707
    %v1709 = vsel %vm1582, %v1171, 0.0
    %1710 = vadd.xlane.f32.xlu0 %v1709
    %v1711 = vpop.xlane.xlu0 %1710
    %v1712 = vsel %vm1582, %v1307, 0.0
    %1713 = vadd.xlane.f32.xlu0 %v1712
    %v1714 = vpop.xlane.xlu0 %1713
    %v1715 = vsel %vm1582, %v1172, 0.0
    %1716 = vadd.xlane.f32.xlu0 %v1715
    %v1717 = vpop.xlane.xlu0 %1716
    %v1718 = vsel %vm1582, %v1308, 0.0
    %1719 = vadd.xlane.f32.xlu0 %v1718
    %v1720 = vpop.xlane.xlu0 %1719
    %v1721 = vsel %vm1582, %v1173, 0.0
    %1722 = vadd.xlane.f32.xlu0 %v1721
    %v1723 = vpop.xlane.xlu0 %1722
    %v1724 = vsel %vm1582, %v1309, 0.0
    %1725 = vadd.xlane.f32.xlu0 %v1724
    %v1726 = vpop.xlane.xlu0 %1725
    %v1727 = vsel %vm1582, %v1438, 0.0
    %1728 = vadd.xlane.f32.xlu0 %v1727
    %v1729 = vpop.xlane.xlu0 %1728
    %v1730 = vsel %vm1582, %v1574, 0.0
    %1731 = vadd.xlane.f32.xlu0 %v1730
    %v1732 = vpop.xlane.xlu0 %1731
    %v1733 = vsel %vm1582, %v1439, 0.0
    %1734 = vadd.xlane.f32.xlu0 %v1733
    %v1735 = vpop.xlane.xlu0 %1734
    %v1736 = vsel %vm1582, %v1575, 0.0
    %1737 = vadd.xlane.f32.xlu0 %v1736
    %v1738 = vpop.xlane.xlu0 %1737
    %v1739 = vsel %vm1582, %v1440, 0.0
    %1740 = vadd.xlane.f32.xlu0 %v1739
    %v1741 = vpop.xlane.xlu0 %1740
    %v1742 = vsel %vm1582, %v1576, 0.0
    %1743 = vadd.xlane.f32.xlu0 %v1742
    %v1744 = vpop.xlane.xlu0 %1743
    %v1745 = vsel %vm1582, %v1441, 0.0
    %1746 = vadd.xlane.f32.xlu0 %v1745
    %v1747 = vpop.xlane.xlu0 %1746
    %v1748 = vsel %vm1582, %v1577, 0.0
    %1749 = vadd.xlane.f32.xlu0 %v1748
    %v1750 = vpop.xlane.xlu0 %1749
    %v1751 = vsel %vm1582, %v1442, 0.0
    %1752 = vadd.xlane.f32.xlu0 %v1751
    %v1753 = vpop.xlane.xlu0 %1752
    %v1754 = vsel %vm1582, %v1578, 0.0
    %1755 = vadd.xlane.f32.xlu0 %v1754
    %v1756 = vpop.xlane.xlu0 %1755
    %v1757 = vsel %vm1582, %v1443, 0.0
    %1758 = vadd.xlane.f32.xlu0 %v1757
    %v1759 = vpop.xlane.xlu0 %1758
    %v1760 = vsel %vm1582, %v1579, 0.0
    %1761 = vadd.xlane.f32.xlu0 %v1760
    %v1762 = vpop.xlane.xlu0 %1761
    %v1763 = vsel %vm1582, %v1444, 0.0
    %1764 = vadd.xlane.f32.xlu0 %v1763
    %v1765 = vpop.xlane.xlu0 %1764
    %v1766 = vsel %vm1582, %v1580, 0.0
    %1767 = vadd.xlane.f32.xlu0 %v1766
    %v1768 = vpop.xlane.xlu0 %1767
    %v1769 = vsel %vm1582, %v1445, 0.0
    %1770 = vadd.xlane.f32.xlu0 %v1769
    %v1771 = vpop.xlane.xlu0 %1770
    %v1772 = vsel %vm1582, %v1581, 0.0
    %1773 = vadd.xlane.f32.xlu0 %v1772
    %v1774 = vpop.xlane.xlu0 %1773
    %v1775 = vld [vmem:[%s5] sm:$0xff]
    %v1776 = vld [vmem:[%s5 + $0x8] sm:$0xff]
    %v1777 = vld [vmem:[%s6] sm:$0xff]
    %v1778 = vld [vmem:[%s6 + $0x8] sm:$0xff]
    %1780 = vset.pattern.permute.xlu0 0
    %1781 = vperm.xlu0 %1780, %v1777
    %v1782 = vpop.permute.xlu0 %1781
    %1785 = vset.pattern.permute.xlu0 0
    %1786 = vperm.xlu0 %1785, %v1778
    %v1787 = vpop.permute.xlu0 %1786
    %v1853 = vlaneseq
    %v1854 = vshrl.u32 %v1853, 7
    %v1855 = vsub.s32 %v36, %v1854
    %v1856 = vrot.slane %v1585, %v1855
    %v1857 = vadd.s32 %v36, 4294967288
    %v1858 = vlaneseq
    %v1859 = vshrl.u32 %v1858, 7
    %v1860 = vsub.s32 %v1857, %v1859
    %v1861 = vrot.slane %v1588, %v1860
    %vm1862 = vcmask 130112
    %v1863 = vsel %vm1862, %v1861, %v1856
    %v1864 = vlaneseq
    %v1865 = vshrl.u32 %v1864, 7
    %v1866 = vsub.s32 %v36, %v1865
    %v1867 = vrot.slane %v1591, %v1866
    %v1868 = vlaneseq
    %v1869 = vshrl.u32 %v1868, 7
    %v1870 = vsub.s32 %v1857, %v1869
    %v1871 = vrot.slane %v1594, %v1870
    %v1872 = vsel %vm1862, %v1871, %v1867
    %v1873 = vlaneseq
    %v1874 = vshrl.u32 %v1873, 7
    %v1875 = vsub.s32 %v36, %v1874
    %v1876 = vrot.slane %v1597, %v1875
    %v1877 = vlaneseq
    %v1878 = vshrl.u32 %v1877, 7
    %v1879 = vsub.s32 %v1857, %v1878
    %v1880 = vrot.slane %v1600, %v1879
    %v1881 = vsel %vm1862, %v1880, %v1876
    %v1882 = vlaneseq
    %v1883 = vshrl.u32 %v1882, 7
    %v1884 = vsub.s32 %v36, %v1883
    %v1885 = vrot.slane %v1603, %v1884
    %v1886 = vlaneseq
    %v1887 = vshrl.u32 %v1886, 7
    %v1888 = vsub.s32 %v1857, %v1887
    %v1889 = vrot.slane %v1606, %v1888
    %v1890 = vsel %vm1862, %v1889, %v1885
    %v1891 = vlaneseq
    %v1892 = vshrl.u32 %v1891, 7
    %v1893 = vsub.s32 %v36, %v1892
    %v1894 = vrot.slane %v1609, %v1893
    %v1895 = vlaneseq
    %v1896 = vshrl.u32 %v1895, 7
    %v1897 = vsub.s32 %v1857, %v1896
    %v1898 = vrot.slane %v1612, %v1897
    %v1899 = vsel %vm1862, %v1898, %v1894
    %v1900 = vlaneseq
    %v1901 = vshrl.u32 %v1900, 7
    %v1902 = vsub.s32 %v36, %v1901
    %v1903 = vrot.slane %v1615, %v1902
    %v1904 = vlaneseq
    %v1905 = vshrl.u32 %v1904, 7
    %v1906 = vsub.s32 %v1857, %v1905
    %v1907 = vrot.slane %v1618, %v1906
    %v1908 = vsel %vm1862, %v1907, %v1903
    %v1909 = vlaneseq
    %v1910 = vshrl.u32 %v1909, 7
    %v1911 = vsub.s32 %v36, %v1910
    %v1912 = vrot.slane %v1621, %v1911
    %v1913 = vlaneseq
    %v1914 = vshrl.u32 %v1913, 7
    %v1915 = vsub.s32 %v1857, %v1914
    %v1916 = vrot.slane %v1624, %v1915
    %v1917 = vsel %vm1862, %v1916, %v1912
    %v1918 = vlaneseq
    %v1919 = vshrl.u32 %v1918, 7
    %v1920 = vsub.s32 %v36, %v1919
    %v1921 = vrot.slane %v1627, %v1920
    %v1922 = vlaneseq
    %v1923 = vshrl.u32 %v1922, 7
    %v1924 = vsub.s32 %v1857, %v1923
    %v1925 = vrot.slane %v1630, %v1924
    %v1926 = vsel %vm1862, %v1925, %v1921
    %v1927 = vlaneseq
    %v1928 = vshrl.u32 %v1927, 7
    %v1929 = vsub.s32 %v36, %v1928
    %v1930 = vrot.slane %v1633, %v1929
    %v1931 = vlaneseq
    %v1932 = vshrl.u32 %v1931, 7
    %v1933 = vsub.s32 %v1857, %v1932
    %v1934 = vrot.slane %v1636, %v1933
    %v1935 = vsel %vm1862, %v1934, %v1930
    %v1936 = vlaneseq
    %v1937 = vshrl.u32 %v1936, 7
    %v1938 = vsub.s32 %v36, %v1937
    %v1939 = vrot.slane %v1639, %v1938
    %v1940 = vlaneseq
    %v1941 = vshrl.u32 %v1940, 7
    %v1942 = vsub.s32 %v1857, %v1941
    %v1943 = vrot.slane %v1642, %v1942
    %v1944 = vsel %vm1862, %v1943, %v1939
    %v1945 = vlaneseq
    %v1946 = vshrl.u32 %v1945, 7
    %v1947 = vsub.s32 %v36, %v1946
    %v1948 = vrot.slane %v1645, %v1947
    %v1949 = vlaneseq
    %v1950 = vshrl.u32 %v1949, 7
    %v1951 = vsub.s32 %v1857, %v1950
    %v1952 = vrot.slane %v1648, %v1951
    %v1953 = vsel %vm1862, %v1952, %v1948
    %v1954 = vlaneseq
    %v1955 = vshrl.u32 %v1954, 7
    %v1956 = vsub.s32 %v36, %v1955
    %v1957 = vrot.slane %v1651, %v1956
    %v1958 = vlaneseq
    %v1959 = vshrl.u32 %v1958, 7
    %v1960 = vsub.s32 %v1857, %v1959
    %v1961 = vrot.slane %v1654, %v1960
    %v1962 = vsel %vm1862, %v1961, %v1957
    %v1963 = vlaneseq
    %v1964 = vshrl.u32 %v1963, 7
    %v1965 = vsub.s32 %v36, %v1964
    %v1966 = vrot.slane %v1657, %v1965
    %v1967 = vlaneseq
    %v1968 = vshrl.u32 %v1967, 7
    %v1969 = vsub.s32 %v1857, %v1968
    %v1970 = vrot.slane %v1660, %v1969
    %v1971 = vsel %vm1862, %v1970, %v1966
    %v1972 = vlaneseq
    %v1973 = vshrl.u32 %v1972, 7
    %v1974 = vsub.s32 %v36, %v1973
    %v1975 = vrot.slane %v1663, %v1974
    %v1976 = vlaneseq
    %v1977 = vshrl.u32 %v1976, 7
    %v1978 = vsub.s32 %v1857, %v1977
    %v1979 = vrot.slane %v1666, %v1978
    %v1980 = vsel %vm1862, %v1979, %v1975
    %v1981 = vlaneseq
    %v1982 = vshrl.u32 %v1981, 7
    %v1983 = vsub.s32 %v36, %v1982
    %v1984 = vrot.slane %v1669, %v1983
    %v1985 = vlaneseq
    %v1986 = vshrl.u32 %v1985, 7
    %v1987 = vsub.s32 %v1857, %v1986
    %v1988 = vrot.slane %v1672, %v1987
    %v1989 = vsel %vm1862, %v1988, %v1984
    %v1990 = vlaneseq
    %v1991 = vshrl.u32 %v1990, 7
    %v1992 = vsub.s32 %v36, %v1991
    %v1993 = vrot.slane %v1675, %v1992
    %v1994 = vlaneseq
    %v1995 = vshrl.u32 %v1994, 7
    %v1996 = vsub.s32 %v1857, %v1995
    %v1997 = vrot.slane %v1678, %v1996
    %v1998 = vsel %vm1862, %v1997, %v1993
    %v1999 = vlaneseq
    %v2000 = vshrl.u32 %v1999, 7
    %v2001 = vsub.s32 %v36, %v2000
    %v2002 = vrot.slane %v1681, %v2001
    %v2003 = vlaneseq
    %v2004 = vshrl.u32 %v2003, 7
    %v2005 = vsub.s32 %v1857, %v2004
    %v2006 = vrot.slane %v1684, %v2005
    %v2007 = vsel %vm1862, %v2006, %v2002
    %v2008 = vlaneseq
    %v2009 = vshrl.u32 %v2008, 7
    %v2010 = vsub.s32 %v36, %v2009
    %v2011 = vrot.slane %v1687, %v2010
    %v2012 = vlaneseq
    %v2013 = vshrl.u32 %v2012, 7
    %v2014 = vsub.s32 %v1857, %v2013
    %v2015 = vrot.slane %v1690, %v2014
    %v2016 = vsel %vm1862, %v2015, %v2011
    %v2017 = vlaneseq
    %v2018 = vshrl.u32 %v2017, 7
    %v2019 = vsub.s32 %v36, %v2018
    %v2020 = vrot.slane %v1693, %v2019
    %v2021 = vlaneseq
    %v2022 = vshrl.u32 %v2021, 7
    %v2023 = vsub.s32 %v1857, %v2022
    %v2024 = vrot.slane %v1696, %v2023
    %v2025 = vsel %vm1862, %v2024, %v2020
    %v2026 = vlaneseq
    %v2027 = vshrl.u32 %v2026, 7
    %v2028 = vsub.s32 %v36, %v2027
    %v2029 = vrot.slane %v1699, %v2028
    %v2030 = vlaneseq
    %v2031 = vshrl.u32 %v2030, 7
    %v2032 = vsub.s32 %v1857, %v2031
    %v2033 = vrot.slane %v1702, %v2032
    %v2034 = vsel %vm1862, %v2033, %v2029
    %v2035 = vlaneseq
    %v2036 = vshrl.u32 %v2035, 7
    %v2037 = vsub.s32 %v36, %v2036
    %v2038 = vrot.slane %v1705, %v2037
    %v2039 = vlaneseq
    %v2040 = vshrl.u32 %v2039, 7
    %v2041 = vsub.s32 %v1857, %v2040
    %v2042 = vrot.slane %v1708, %v2041
    %v2043 = vsel %vm1862, %v2042, %v2038
    %v2044 = vlaneseq
    %v2045 = vshrl.u32 %v2044, 7
    %v2046 = vsub.s32 %v36, %v2045
    %v2047 = vrot.slane %v1711, %v2046
    %v2048 = vlaneseq
    %v2049 = vshrl.u32 %v2048, 7
    %v2050 = vsub.s32 %v1857, %v2049
    %v2051 = vrot.slane %v1714, %v2050
    %v2052 = vsel %vm1862, %v2051, %v2047
    %v2053 = vlaneseq
    %v2054 = vshrl.u32 %v2053, 7
    %v2055 = vsub.s32 %v36, %v2054
    %v2056 = vrot.slane %v1717, %v2055
    %v2057 = vlaneseq
    %v2058 = vshrl.u32 %v2057, 7
    %v2059 = vsub.s32 %v1857, %v2058
    %v2060 = vrot.slane %v1720, %v2059
    %v2061 = vsel %vm1862, %v2060, %v2056
    %v2062 = vlaneseq
    %v2063 = vshrl.u32 %v2062, 7
    %v2064 = vsub.s32 %v36, %v2063
    %v2065 = vrot.slane %v1723, %v2064
    %v2066 = vlaneseq
    %v2067 = vshrl.u32 %v2066, 7
    %v2068 = vsub.s32 %v1857, %v2067
    %v2069 = vrot.slane %v1726, %v2068
    %v2070 = vsel %vm1862, %v2069, %v2065
    %v2071 = vlaneseq
    %v2072 = vshrl.u32 %v2071, 7
    %v2073 = vsub.s32 %v36, %v2072
    %v2074 = vrot.slane %v1729, %v2073
    %v2075 = vlaneseq
    %v2076 = vshrl.u32 %v2075, 7
    %v2077 = vsub.s32 %v1857, %v2076
    %v2078 = vrot.slane %v1732, %v2077
    %v2079 = vsel %vm1862, %v2078, %v2074
    %v2080 = vlaneseq
    %v2081 = vshrl.u32 %v2080, 7
    %v2082 = vsub.s32 %v36, %v2081
    %v2083 = vrot.slane %v1735, %v2082
    %v2084 = vlaneseq
    %v2085 = vshrl.u32 %v2084, 7
    %v2086 = vsub.s32 %v1857, %v2085
    %v2087 = vrot.slane %v1738, %v2086
    %v2088 = vsel %vm1862, %v2087, %v2083
    %v2089 = vlaneseq
    %v2090 = vshrl.u32 %v2089, 7
    %v2091 = vsub.s32 %v36, %v2090
    %v2092 = vrot.slane %v1741, %v2091
    %v2093 = vlaneseq
    %v2094 = vshrl.u32 %v2093, 7
    %v2095 = vsub.s32 %v1857, %v2094
    %v2096 = vrot.slane %v1744, %v2095
    %v2097 = vsel %vm1862, %v2096, %v2092
    %v2098 = vlaneseq
    %v2099 = vshrl.u32 %v2098, 7
    %v2100 = vsub.s32 %v36, %v2099
    %v2101 = vrot.slane %v1747, %v2100
    %v2102 = vlaneseq
    %v2103 = vshrl.u32 %v2102, 7
    %v2104 = vsub.s32 %v1857, %v2103
    %v2105 = vrot.slane %v1750, %v2104
    %v2106 = vsel %vm1862, %v2105, %v2101
    %v2107 = vlaneseq
    %v2108 = vshrl.u32 %v2107, 7
    %v2109 = vsub.s32 %v36, %v2108
    %v2110 = vrot.slane %v1753, %v2109
    %v2111 = vlaneseq
    %v2112 = vshrl.u32 %v2111, 7
    %v2113 = vsub.s32 %v1857, %v2112
    %v2114 = vrot.slane %v1756, %v2113
    %v2115 = vsel %vm1862, %v2114, %v2110
    %v2116 = vlaneseq
    %v2117 = vshrl.u32 %v2116, 7
    %v2118 = vsub.s32 %v36, %v2117
    %v2119 = vrot.slane %v1759, %v2118
    %v2120 = vlaneseq
    %v2121 = vshrl.u32 %v2120, 7
    %v2122 = vsub.s32 %v1857, %v2121
    %v2123 = vrot.slane %v1762, %v2122
    %v2124 = vsel %vm1862, %v2123, %v2119
    %v2125 = vlaneseq
    %v2126 = vshrl.u32 %v2125, 7
    %v2127 = vsub.s32 %v36, %v2126
    %v2128 = vrot.slane %v1765, %v2127
    %v2129 = vlaneseq
    %v2130 = vshrl.u32 %v2129, 7
    %v2131 = vsub.s32 %v1857, %v2130
    %v2132 = vrot.slane %v1768, %v2131
    %v2133 = vsel %vm1862, %v2132, %v2128
    %v2134 = vlaneseq
    %v2135 = vshrl.u32 %v2134, 7
    %v2136 = vsub.s32 %v36, %v2135
    %v2137 = vrot.slane %v1771, %v2136
    %v2138 = vlaneseq
    %v2139 = vshrl.u32 %v2138, 7
    %v2140 = vsub.s32 %v1857, %v2139
    %v2141 = vrot.slane %v1774, %v2140
    %v2142 = vsel %vm1862, %v2141, %v2137
    %vm2143 = vcmask 1041409
    %v2144 = vsel %vm2143, %v1872, %v1863
    %vm2145 = vcmask 1042434
    %v2146 = vsel %vm2145, %v1881, %v2144
    %vm2147 = vcmask 1043459
    %v2148 = vsel %vm2147, %v1890, %v2146
    %vm2149 = vcmask 1044484
    %v2150 = vsel %vm2149, %v1899, %v2148
    %vm2151 = vcmask 1045509
    %v2152 = vsel %vm2151, %v1908, %v2150
    %vm2153 = vcmask 1046534
    %v2154 = vsel %vm2153, %v1917, %v2152
    %vm2155 = vcmask 1047559
    %v2156 = vsel %vm2155, %v1926, %v2154
    %v2157 = vsel %vm2143, %v1944, %v1935
    %v2158 = vsel %vm2145, %v1953, %v2157
    %v2159 = vsel %vm2147, %v1962, %v2158
    %v2160 = vsel %vm2149, %v1971, %v2159
    %v2161 = vsel %vm2151, %v1980, %v2160
    %v2162 = vsel %vm2153, %v1989, %v2161
    %v2163 = vsel %vm2155, %v1998, %v2162
    %v2164 = vsel %vm2143, %v2016, %v2007
    %v2165 = vsel %vm2145, %v2025, %v2164
    %v2166 = vsel %vm2147, %v2034, %v2165
    %v2167 = vsel %vm2149, %v2043, %v2166
    %v2168 = vsel %vm2151, %v2052, %v2167
    %v2169 = vsel %vm2153, %v2061, %v2168
    %v2170 = vsel %vm2155, %v2070, %v2169
    %v2171 = vsel %vm2143, %v2088, %v2079
    %v2172 = vsel %vm2145, %v2097, %v2171
    %v2173 = vsel %vm2147, %v2106, %v2172
    %v2174 = vsel %vm2149, %v2115, %v2173
    %v2175 = vsel %vm2151, %v2124, %v2174
    %v2176 = vsel %vm2153, %v2133, %v2175
    %v2177 = vsel %vm2155, %v2142, %v2176
    %vm2182 = vcmask 261120
    %v2184 = vsel %vm2182, %v1775, 0
    %v2187 = vsel %vm2182, %v1776, 0
    %2189 = vmatprep.subr.mxu0 0.0
    %2190 = vmatpush1.msra.mxu0 0.0
    %2191 = vmatprep.subr.mxu0 0.0
    %2192 = vmatpush1.msra.mxu0 0.0
    %2193 = vmatprep.subr.mxu0 0.0
    %2194 = vmatpush1.msra.mxu0 0.0
    %2195 = vmatprep.subr.mxu0 0.0
    %2196 = vmatpush1.msra.mxu0 0.0
    %2197 = vmatprep.subr.mxu0 0.0
    %2198 = vmatpush1.msra.mxu0 0.0
    %2199 = vmatprep.subr.mxu0 0.0
    %2200 = vmatpush1.msra.mxu0 0.0
    %2201 = vmatprep.subr.mxu0 0.0
    %2202 = vmatpush1.msra.mxu0 0.0
    %2203 = vmatprep.subr.mxu0 0.0
    %2204 = vmatpush1.msra.mxu0 0.0
    %2205 = vmatprep.subr.mxu0 0.0
    %2206 = vmatpush1.msra.mxu0 0.0
    %2207 = vmatprep.subr.mxu0 0.0
    %2208 = vmatpush1.msra.mxu0 0.0
    %2209 = vmatprep.subr.mxu0 0.0
    %2210 = vmatpush1.msra.mxu0 0.0
    %2211 = vmatprep.subr.mxu0 0.0
    %2212 = vmatpush1.msra.mxu0 0.0
    %2213 = vmatprep.subr.mxu0 0.0
    %2214 = vmatpush1.msra.mxu0 %v2177
    %2215 = vmatprep.subr.mxu0 0.0
    %2216 = vmatpush1.msra.mxu0 %v2170
    %2217 = vmatprep.subr.mxu0 0.0
    %2218 = vmatpush1.msra.mxu0 %v2163
    %2219 = vmatprep.subr.mxu0 0.0
    %2220 = vmatpush1.msra.mxu0 %v2156
    %2221 = vmatprep.subr.mxu0 0.0
    %2222 = vmatpush2.msra.mxu0 0.0
    %2223 = vmatprep.subr.mxu0 0.0
    %2224 = vmatpush2.msra.mxu0 0.0
    %2225 = vmatprep.subr.mxu0 0.0
    %2226 = vmatpush2.msra.mxu0 0.0
    %2227 = vmatprep.subr.mxu0 0.0
    %2228 = vmatpush2.msra.mxu0 0.0
    %2229 = vmatprep.subr.mxu0 0.0
    %2230 = vmatpush2.msra.mxu0 0.0
    %2231 = vmatprep.subr.mxu0 0.0
    %2232 = vmatpush2.msra.mxu0 0.0
    %2233 = vmatprep.subr.mxu0 0.0
    %2234 = vmatpush2.msra.mxu0 0.0
    %2235 = vmatprep.subr.mxu0 0.0
    %2236 = vmatpush2.msra.mxu0 0.0
    %2237 = vmatprep.subr.mxu0 0.0
    %2238 = vmatpush2.msra.mxu0 0.0
    %2239 = vmatprep.subr.mxu0 0.0
    %2240 = vmatpush2.msra.mxu0 0.0
    %2241 = vmatprep.subr.mxu0 0.0
    %2242 = vmatpush2.msra.mxu0 0.0
    %2243 = vmatprep.subr.mxu0 0.0
    %2244 = vmatpush2.msra.mxu0 0.0
    %2245 = vmatprep.subr.mxu0 0.0
    %2246 = vmatpush2.msra.mxu0 0.0
    %2247 = vmatprep.subr.mxu0 0.0
    %2248 = vmatpush2.msra.mxu0 0.0
    %2249 = vmatprep.subr.mxu0 0.0
    %2250 = vmatpush2.msra.mxu0 0.0
    %2251 = vmatprep.subr.mxu0 0.0
    %2252 = vmatpush2.msra.mxu0 0.0
    %2253 = vmatprep.mubr.f32.mxu0 0.0
    %2254 = vmatmul.mubr.f32.gmra.mxu0 %v2184
    %v2255 = vpop.f32.mrf.mxu0
    %v2256 = vadd.f32 %v1782, %v2255
    %v2257 = vpop.f32.mrf.mxu0
    %2258 = vmatprep.mubr.f32.mxu0 0.0
    %2259 = vmatmul.mubr.f32.gmra.mxu0 %v2187
    %v2260 = vpop.f32.mrf.mxu0
    %v2261 = vadd.f32 %v1787, %v2260
    %v2262 = vpop.f32.mrf.mxu0
    %2263 = vdwg.mxu0
    %v2264 = vmax.f32 %v2256, 0.0
    %v2265 = vmax.f32 %v2261, 0.0
    %v2266 = vld [vmem:[%s7] sm:$0xff]
    %v2267 = vld [vmem:[%s7 + $0x8] sm:$0xff]
    %2269 = vset.pattern.permute.xlu0 0
    %2270 = vperm.xlu0 %2269, %v2266
    %v2271 = vpop.permute.xlu0 %2270
    %2274 = vset.pattern.permute.xlu0 0
    %2275 = vperm.xlu0 %2274, %v2267
    %v2276 = vpop.permute.xlu0 %2275
    %v2278 = vmul.f32 %v2264, %v2271
    %v2279 = vmul.f32 %v2265, %v2276
    %vm2280 = vcmask 130048
    %v2281 = vsel %vm2280, %v2278, 0.0
    %v2282 = vsel %vm2280, %v2279, 0.0
    %v2283 = vadd.f32 %v2281, %v2282
    %v2284 = vrot.slane %v2283, 4
    %v2285 = vadd.f32 %v2283, %v2284
    %v2286 = vrot.slane %v2285, 2
    %v2287 = vadd.f32 %v2285, %v2286
    %v2288 = vrot.slane %v2287, 1
    %v2289 = vadd.f32 %v2287, %v2288
    %v2290 = vld [vmem:[#allocation2] sm:$0x1]
    %2292 = vset.pattern.permute.xlu0 0
    %2293 = vperm.xlu0 %2292, %v2290
    %v2294 = vpop.permute.xlu0 %2293
    %v2296 = vlaneseq
    %v2297 = vshrl.u32 %v2296, 7
    %v2298 = vsub.s32 0, %v2297
    %v2299 = vrot.slane %v2294, %v2298
    %v2300 = vadd.f32 %v2289, %v2299
    %v2301 = vxor.u32 %v2300, 2147483648
    %v2302 = vmul.f32 %v2301, 1.442695
    %v2303 = vpow.pop %v2302
    %v2304 = vadd.f32 %v2303, 1.0
    %v2305 = vrcp.pop %v2304
    %v2306 = vmul.f32 1.0, %v2305
    %vm2307 = vcmask 122880
    %2308 = vst.msk [vmem:[#allocation3] sm:$0x1] %vm2307, %v2306
    // Predicated region
    $region38: #{tpu_custom_call.1} parent=1 // pred_check
      _
    $region39: #{tpu_custom_call.1} parent=1 // pred_check_branch
      %2310 = sbr.rel (0) target = $region41
    $region40: #{tpu_custom_call.1} parent=1 // pred_region
      %s2312 = ssub.s32 16, 16
      %2313 = vsyncadd [#allocation4], %s2312
      %s2315 = sshll.u32 [#allocation3], 4
      %s2316 = int_to_ptr.vmem [resolvable:$true] %s2315
      %2318 = dma.vmem_to_hbm [thread:$0]  %s2316, 16, %s9, [#allocation4]
    $region41: #{tpu_custom_call.1} parent=1 // pred_fallthru
      _
    // Predicated region
    $region42: #{tpu_custom_call.1} parent=1 // pred_check
      _
    $region43: #{tpu_custom_call.1} parent=1 // pred_check_branch
      %2320 = sbr.rel (0) target = $region45
    $region44: #{tpu_custom_call.1} parent=1 // pred_region
      %2321 = dma.done [#allocation4], 16
    $region45: #{tpu_custom_call.1} parent=1 // pred_fallthru
      _
    %2322 = vsyncpa [#allocation4], 1

</llo_original>
